<compile_context>
chip_gen: v7x
topology: tpu7x:2x2x1
jax: 0.10.0
libtpu: 0.0.40
codegen_flags: <defaults>
</compile_context>

<pallas_src>
import functools

import jax
import jax.numpy as jnp
from jax import lax
from jax.experimental import pallas as pl
from jax.experimental.pallas import tpu as pltpu


def head_kernel(x_ref, w1_ref, b1_ref, w2t_ref, b2_ref, o_ref, x3_ref, *, L):
    # x_ref  : (M, Cin)    compute-dtype input slab, M = B*L rows (flattened NLC)
    # w1_ref : (3*Cin, H)  conv1 taps stacked along K: [tap0; tap1; tap2]
    # b1_ref : (1, H)      f32
    # w2t_ref: (3, H)      conv2 taps as rows
    # b2_ref : (1,)        f32 scalar in SMEM
    # o_ref  : (1, 1, M)   f32, fully lane-dense output block
    # x3_ref : (M, 3*Cin)  VMEM scratch for the conv1 im2col slab
    M, Cin = x_ref.shape

    xv = x_ref[...]                                              # (M, Cin)
    zero = jnp.zeros((), xv.dtype)
    # Position of each row within its length-L sequence; the conv boundary is
    # realised by zeroing rows that would otherwise leak across batch elements.
    rt = lax.broadcasted_iota(jnp.int32, (M, 1), 0) % L

    zrow = jnp.zeros((1, Cin), xv.dtype)
    x_prev = jnp.concatenate([zrow, xv[:M - 1, :]], axis=0)      # x[t-1]
    x_next = jnp.concatenate([xv[1:, :], zrow], axis=0)          # x[t+1]

    # ---- conv1 im2col slab, built in place (lane-aligned column blocks) ----
    x3_ref[:, 0:Cin] = jnp.where(rt == 0, zero, x_prev)
    x3_ref[:, Cin:2 * Cin] = xv
    x3_ref[:, 2 * Cin:3 * Cin] = jnp.where(rt == L - 1, zero, x_next)

    # ---- conv1: one (M, 3*Cin) @ (3*Cin, H) matmul, f32 accumulate + ReLU --
    h = jnp.dot(x3_ref[...], w1_ref[...], preferred_element_type=jnp.float32)
    h = jnp.maximum(h + b1_ref[...], 0.0)                        # (M, H) f32

    # ---- conv2, lane-major: (3, H) x (M, H)^T -> (3, M) --------------------
    # The t+-1 tap shifts ride on the matmul RHS (cheap sublane slices); the
    # sequence boundary is applied as a lane mask on the (1, M) results so the
    # final sum is already lane-dense for the store.
    h_c = h.astype(w2t_ref.dtype)                                # (M, H)
    zh = jnp.zeros((1, h_c.shape[1]), h_c.dtype)
    h_prev = jnp.concatenate([zh, h_c[:M - 1, :]], axis=0)       # h[m-1]
    h_next = jnp.concatenate([h_c[1:, :], zh], axis=0)           # h[m+1]

    def nt_dot(rhs):  # (3, H) x (M, H)^T -> (3, M), f32 accumulation
        return lax.dot_general(w2t_ref[...], rhs,
                               dimension_numbers=(((1,), (1,)), ((), ())),
                               preferred_element_type=jnp.float32)

    p0 = nt_dot(h_prev)[0:1, :]       # tap k=0 acting on x-window t-1
    p1 = nt_dot(h_c)[1:2, :]          # tap k=1 acting on t
    p2 = nt_dot(h_next)[2:3, :]       # tap k=2 acting on t+1

    lt = lax.broadcasted_iota(jnp.int32, (1, M), 1) % L
    p0 = jnp.where(lt == 0, 0.0, p0)          # no left neighbour at t == 0
    p2 = jnp.where(lt == L - 1, 0.0, p2)      # no right neighbour at t == L-1

    out_row = p0 + p1 + p2 + b2_ref[0]                           # (1, M) f32
    o_ref[...] = out_row.reshape(1, 1, M).astype(o_ref.dtype)


def classification_head(x, w1, b1, w2, b2, *, block_batch=None,
                        compute_dtype=jnp.bfloat16):
    """x: (N, Cin, L) float32 (PyTorch NCL).  Returns (N, 1, L)."""
    N, Cin, L = x.shape
    H = w1.shape[0]
    assert w1.shape == (H, Cin, 3) and w2.shape == (1, H, 3)

    if block_batch is None:
        # ~9 MiB live VMEM at B=128 (bf16 compute): fits even v5e's 16 MiB
        # default scoped limit with headroom; large N still yields >=4 grid
        # steps so both v7x TensorCores get work and the input DMA pipelines.
        block_batch = 128
    B = min(block_batch, pl.cdiv(N, 4))
    B = max(8, ((B + 7) // 8) * 8)            # sublane-align the block batch
    n_blocks = pl.cdiv(N, B)
    N_pad = n_blocks * B
    M = B * L                                 # rows per grid step

    # Single fused HBM pass: NCL -> NLC transpose + cast, flattened so the
    # kernel's input block (B*L, Cin) is fully lane dense (Cin on lanes).
    x_flat = jnp.transpose(x, (0, 2, 1)).astype(compute_dtype).reshape(N * L, Cin)
    if N_pad != N:
        x_flat = jnp.pad(x_flat, ((0, (N_pad - N) * L), (0, 0)))

    # conv1 taps stacked along K (rows [k*Cin:(k+1)*Cin] = tap k, (in, out)).
    w1_cat = jnp.transpose(w1, (2, 1, 0)).reshape(3 * Cin, H).astype(compute_dtype)
    # conv2 taps as rows of a (3, H) matrix (lane-major conv2).
    w2t = jnp.transpose(w2[0]).astype(compute_dtype)             # (3, H)
    b1_r = b1.reshape(1, H).astype(jnp.float32)
    b2_r = b2.reshape(1).astype(jnp.float32)

    itemsize = jnp.dtype(compute_dtype).itemsize
    m_total = N_pad * L
    cost = pl.CostEstimate(
        flops=2 * m_total * (3 * Cin) * H + 3 * 2 * m_total * H * 3,
        transcendentals=0,
        bytes_accessed=(m_total * Cin + 3 * Cin * H + 3 * H) * itemsize
        + (H + 1 + m_total) * 4)

    kernel = functools.partial(head_kernel, L=L)
    out = pl.pallas_call(
        kernel,
        out_shape=jax.ShapeDtypeStruct((n_blocks, 1, M), jnp.float32),
        grid=(n_blocks,),
        in_specs=[
            pl.BlockSpec((M, Cin), lambda n: (n, 0)),
            pl.BlockSpec((3 * Cin, H), lambda n: (0, 0)),
            pl.BlockSpec((1, H), lambda n: (0, 0)),
            pl.BlockSpec((3, H), lambda n: (0, 0)),
            pl.BlockSpec(memory_space=pltpu.MemorySpace.SMEM),
        ],
        out_specs=pl.BlockSpec((1, 1, M), lambda n: (n, 0, 0)),
        scratch_shapes=[pltpu.VMEM((M, 3 * Cin), compute_dtype)],
        compiler_params=pltpu.CompilerParams(
            dimension_semantics=("parallel",),
            vmem_limit_bytes=48 * 1024 * 1024),
        cost_estimate=cost,
    )(x_flat, w1_cat, b1_r, w2t, b2_r)

    # (n_blocks, 1, B*L) -> (N, 1, L): pure reshapes + row slice, free in XLA.
    return out.reshape(N_pad, L)[:N].reshape(N, 1, L).astype(x.dtype)


def reference_head(x, w1, b1, w2, b2):
    """Pure-JAX reference using lax.conv_general_dilated (NCL semantics)."""
    dn = ('NCH', 'OIH', 'NCH')
    y = lax.conv_general_dilated(x, w1, window_strides=(1,),
                                 padding=((1, 1),), dimension_numbers=dn)
    y = jnp.maximum(y + b1.reshape(1, -1, 1), 0.0)
    z = lax.conv_general_dilated(y, w2, window_strides=(1,),
                                 padding=((1, 1),), dimension_numbers=dn)
    return z + b2.reshape(1, -1, 1)


if __name__ == "__main__":
    # Shapes consistent with the module defaults:
    # input_dim=128 channels, hidden_dim=256, batch=2, seq length=16.
    N, Cin, H, L = 2, 128, 256, 16

    key = jax.random.PRNGKey(0)
    kx, k1, k2, k3, k4 = jax.random.split(key, 5)

    x = jax.random.normal(kx, (N, Cin, L), dtype=jnp.float32)
    # Conv1d weight shapes follow PyTorch: (out_ch, in_ch, kernel)
    w1 = 0.05 * jax.random.normal(k1, (H, Cin, 3), dtype=jnp.float32)
    b1 = 0.05 * jax.random.normal(k2, (H,), dtype=jnp.float32)
    w2 = 0.05 * jax.random.normal(k3, (1, H, 3), dtype=jnp.float32)
    b2 = 0.05 * jax.random.normal(k4, (1,), dtype=jnp.float32)

    ref = reference_head(x, w1, b1, w2, b2)

    # Exact-math check: f32 operands end-to-end.
    out_f32 = classification_head(x, w1, b1, w2, b2, compute_dtype=jnp.float32)
    out_f32 = jax.block_until_ready(out_f32)
    assert out_f32.shape == (N, 1, L), out_f32.shape
    assert jnp.allclose(out_f32, ref, rtol=2e-3, atol=2e-3), (
        float(jnp.max(jnp.abs(out_f32 - ref))))

    # Fast path: bf16 MXU operands with f32 accumulation.
    out_bf16 = classification_head(x, w1, b1, w2, b2, compute_dtype=jnp.bfloat16)
    out_bf16 = jax.block_until_ready(out_bf16)
    assert out_bf16.shape == (N, 1, L), out_bf16.shape
    assert jnp.allclose(out_bf16, ref, rtol=5e-2, atol=5e-2), (
        float(jnp.max(jnp.abs(out_bf16 - ref))))

    # Multi-block grid + batch padding path (n_blocks > 1).
    N2 = 20
    x2 = jax.random.normal(kx, (N2, Cin, L), dtype=jnp.float32)
    ref2 = reference_head(x2, w1, b1, w2, b2)
    out2 = classification_head(x2, w1, b1, w2, b2, block_batch=8,
                               compute_dtype=jnp.float32)
    out2 = jax.block_until_ready(out2)
    assert out2.shape == (N2, 1, L), out2.shape
    assert jnp.allclose(out2, ref2, rtol=2e-3, atol=2e-3), (
        float(jnp.max(jnp.abs(out2 - ref2))))

    print("KERNEL_OK")
</pallas_src>

<mosaic_0001>
module attributes {stable_mosaic.version = 11 : i64} {
  func.func @head_kernel(%arg0: i32, %arg1: memref<128x128xf32, #tpu.memory_space<vmem>>, %arg2: memref<384x256xf32, #tpu.memory_space<vmem>>, %arg3: memref<1x256xf32, #tpu.memory_space<vmem>>, %arg4: memref<3x256xf32, #tpu.memory_space<vmem>>, %arg5: memref<1xf32, #tpu.memory_space<smem>>, %arg6: memref<1x1x128xf32, #tpu.memory_space<vmem>>, %arg7: memref<128x384xf32, #tpu.memory_space<vmem>>) attributes {dimension_semantics = [#tpu.dimension_semantics<parallel>], iteration_bounds = array<i64: 1>, scalar_prefetch = 0 : i64, scratch_operands = 1 : i64, tpu.core_type = #tpu.core_type<tc>, window_params = [{transform_indices = @transform_0, window_bounds = array<i64: 128, 128>}, {pipeline_mode = #tpu.pipeline_mode<synchronous>, transform_indices = @transform_1, window_bounds = array<i64: 384, 256>}, {pipeline_mode = #tpu.pipeline_mode<synchronous>, transform_indices = @transform_2, window_bounds = array<i64: 1, 256>}, {pipeline_mode = #tpu.pipeline_mode<synchronous>, transform_indices = @transform_3, window_bounds = array<i64: 3, 256>}, {transform_indices = @transform_4, window_bounds = array<i64: 1>}, {transform_indices = @transform_5, window_bounds = array<i64: 1, 1, 128>}]} {
    %c0 = arith.constant 0 : index
    %c0_0 = arith.constant 0 : index
    %0 = vector.load %arg1[%c0, %c0_0] : memref<128x128xf32, #tpu.memory_space<vmem>>, vector<128x128xf32>
    %1 = tpu.iota {dimensions = array<i32: 0>} : vector<128x1xi32>
    %c16_i32 = arith.constant 16 : i32
    %c0_i32 = arith.constant 0 : i32
    %2 = arith.cmpi eq, %c16_i32, %c0_i32 : i32
    %c1_i32 = arith.constant 1 : i32
    %3 = arith.select %2, %c1_i32, %c16_i32 : i32
    %4 = vector.broadcast %3 : i32 to vector<128x1xi32>
    %5 = arith.remsi %1, %4 : vector<128x1xi32>
    %c0_i32_1 = arith.constant 0 : i32
    %6 = vector.broadcast %c0_i32_1 : i32 to vector<128x1xi32>
    %7 = arith.cmpi ne, %5, %6 : vector<128x1xi32>
    %c0_i32_2 = arith.constant 0 : i32
    %8 = vector.broadcast %c0_i32_2 : i32 to vector<128x1xi32>
    %9 = arith.cmpi slt, %5, %8 : vector<128x1xi32>
    %c0_i32_3 = arith.constant 0 : i32
    %10 = arith.cmpi slt, %3, %c0_i32_3 : i32
    %11 = vector.broadcast %10 : i1 to vector<128x1xi1>
    %12 = vector.broadcast %11 : vector<128x1xi1> to vector<128x1xi1>
    %13 = arith.xori %9, %12 : vector<128x1xi1>
    %14 = arith.andi %13, %7 : vector<128x1xi1>
    %15 = vector.broadcast %3 : i32 to vector<128x1xi32>
    %16 = arith.addi %5, %15 : vector<128x1xi32>
    %17 = arith.select %14, %16, %5 : vector<128x1xi1>, vector<128x1xi32>
    %cst = arith.constant 0.000000e+00 : f32
    %18 = vector.broadcast %cst : f32 to vector<1x128xf32>
    %19 = vector.extract_strided_slice %0 {offsets = [0, 0], sizes = [127, 128], strides = [1, 1]} : vector<128x128xf32> to vector<127x128xf32>
    %20 = tpu.concatenate %18, %19 in 0 : vector<1x128xf32>, vector<127x128xf32> -> vector<128x128xf32>
    %21 = vector.extract_strided_slice %0 {offsets = [1, 0], sizes = [127, 128], strides = [1, 1]} : vector<128x128xf32> to vector<127x128xf32>
    %22 = tpu.concatenate %21, %18 in 0 : vector<127x128xf32>, vector<1x128xf32> -> vector<128x128xf32>
    %c0_i32_4 = arith.constant 0 : i32
    %23 = vector.broadcast %c0_i32_4 : i32 to vector<128x1xi32>
    %24 = arith.cmpi eq, %17, %23 : vector<128x1xi32>
    %cst_5 = arith.constant 0.000000e+00 : f32
    %25 = vector.shape_cast %24 : vector<128x1xi1> to vector<128x1xi1>
    %26 = vector.broadcast %25 : vector<128x1xi1> to vector<128x128xi1>
    %27 = vector.broadcast %cst_5 : f32 to vector<128x128xf32>
    %28 = arith.select %26, %27, %20 : vector<128x128xi1>, vector<128x128xf32>
    %c0_6 = arith.constant 0 : index
    %c0_7 = arith.constant 0 : index
    %29 = vector.load %arg7[%c0_6, %c0_7] : memref<128x384xf32, #tpu.memory_space<vmem>>, vector<128x128xf32>
    tpu.vector_store %arg7[%c0_6, %c0_7], %28 {strides = array<i32>} : memref<128x384xf32, #tpu.memory_space<vmem>>, vector<128x128xf32>,
    %c0_8 = arith.constant 0 : index
    %c128 = arith.constant 128 : index
    %30 = vector.load %arg7[%c0_8, %c128] : memref<128x384xf32, #tpu.memory_space<vmem>>, vector<128x128xf32>
    tpu.vector_store %arg7[%c0_8, %c128], %0 {strides = array<i32>} : memref<128x384xf32, #tpu.memory_space<vmem>>, vector<128x128xf32>,
    %c15_i32 = arith.constant 15 : i32
    %31 = vector.broadcast %c15_i32 : i32 to vector<128x1xi32>
    %32 = arith.cmpi eq, %17, %31 : vector<128x1xi32>
    %cst_9 = arith.constant 0.000000e+00 : f32
    %33 = vector.shape_cast %32 : vector<128x1xi1> to vector<128x1xi1>
    %34 = vector.broadcast %33 : vector<128x1xi1> to vector<128x128xi1>
    %35 = vector.broadcast %cst_9 : f32 to vector<128x128xf32>
    %36 = arith.select %34, %35, %22 : vector<128x128xi1>, vector<128x128xf32>
    %c0_10 = arith.constant 0 : index
    %c256 = arith.constant 256 : index
    %37 = vector.load %arg7[%c0_10, %c256] : memref<128x384xf32, #tpu.memory_space<vmem>>, vector<128x128xf32>
    tpu.vector_store %arg7[%c0_10, %c256], %36 {strides = array<i32>} : memref<128x384xf32, #tpu.memory_space<vmem>>, vector<128x128xf32>,
    %c0_11 = arith.constant 0 : index
    %c0_12 = arith.constant 0 : index
    %38 = vector.load %arg7[%c0_11, %c0_12] : memref<128x384xf32, #tpu.memory_space<vmem>>, vector<128x384xf32>
    %c0_13 = arith.constant 0 : index
    %c0_14 = arith.constant 0 : index
    %39 = vector.load %arg2[%c0_13, %c0_14] : memref<384x256xf32, #tpu.memory_space<vmem>>, vector<384x256xf32>
    %cst_15 = arith.constant dense<0.000000e+00> : vector<128x256xf32>
    %40 = tpu.matmul %38, %39, %cst_15 {dimension_numbers = #tpu.dot_dimension_numbers<[1], [0], [0], [1], [0, 0, 1, 1], [], []>} : vector<128x384xf32>, vector<384x256xf32>, vector<128x256xf32> -> vector<128x256xf32>
    %c0_16 = arith.constant 0 : index
    %c0_17 = arith.constant 0 : index
    %41 = vector.load %arg3[%c0_16, %c0_17] : memref<1x256xf32, #tpu.memory_space<vmem>>, vector<1x256xf32>
    %42 = vector.broadcast %41 : vector<1x256xf32> to vector<128x256xf32>
    %43 = arith.addf %40, %42 : vector<128x256xf32>
    %cst_18 = arith.constant 0.000000e+00 : f32
    %44 = vector.broadcast %cst_18 : f32 to vector<128x256xf32>
    %45 = arith.maximumf %43, %44 : vector<128x256xf32>
    %cst_19 = arith.constant 0.000000e+00 : f32
    %46 = vector.broadcast %cst_19 : f32 to vector<1x256xf32>
    %47 = vector.extract_strided_slice %45 {offsets = [0, 0], sizes = [127, 256], strides = [1, 1]} : vector<128x256xf32> to vector<127x256xf32>
    %48 = tpu.concatenate %46, %47 in 0 : vector<1x256xf32>, vector<127x256xf32> -> vector<128x256xf32>
    %49 = vector.extract_strided_slice %45 {offsets = [1, 0], sizes = [127, 256], strides = [1, 1]} : vector<128x256xf32> to vector<127x256xf32>
    %50 = tpu.concatenate %49, %46 in 0 : vector<127x256xf32>, vector<1x256xf32> -> vector<128x256xf32>
    %c0_20 = arith.constant 0 : index
    %c0_21 = arith.constant 0 : index
    %51 = vector.load %arg4[%c0_20, %c0_21] : memref<3x256xf32, #tpu.memory_space<vmem>>, vector<3x256xf32>
    %cst_22 = arith.constant dense<0.000000e+00> : vector<3x128xf32>
    %52 = tpu.matmul %51, %48, %cst_22 {dimension_numbers = #tpu.dot_dimension_numbers<[1], [1], [0], [0], [0, 0, 1, 0], [], []>} : vector<3x256xf32>, vector<128x256xf32>, vector<3x128xf32> -> vector<3x128xf32>
    %53 = vector.extract_strided_slice %52 {offsets = [0, 0], sizes = [1, 128], strides = [1, 1]} : vector<3x128xf32> to vector<1x128xf32>
    %c0_23 = arith.constant 0 : index
    %c0_24 = arith.constant 0 : index
    %54 = vector.load %arg4[%c0_23, %c0_24] : memref<3x256xf32, #tpu.memory_space<vmem>>, vector<3x256xf32>
    %cst_25 = arith.constant dense<0.000000e+00> : vector<3x128xf32>
    %55 = tpu.matmul %54, %45, %cst_25 {dimension_numbers = #tpu.dot_dimension_numbers<[1], [1], [0], [0], [0, 0, 1, 0], [], []>} : vector<3x256xf32>, vector<128x256xf32>, vector<3x128xf32> -> vector<3x128xf32>
    %56 = vector.extract_strided_slice %55 {offsets = [1, 0], sizes = [1, 128], strides = [1, 1]} : vector<3x128xf32> to vector<1x128xf32>
    %c0_26 = arith.constant 0 : index
    %c0_27 = arith.constant 0 : index
    %57 = vector.load %arg4[%c0_26, %c0_27] : memref<3x256xf32, #tpu.memory_space<vmem>>, vector<3x256xf32>
    %cst_28 = arith.constant dense<0.000000e+00> : vector<3x128xf32>
    %58 = tpu.matmul %57, %50, %cst_28 {dimension_numbers = #tpu.dot_dimension_numbers<[1], [1], [0], [0], [0, 0, 1, 0], [], []>} : vector<3x256xf32>, vector<128x256xf32>, vector<3x128xf32> -> vector<3x128xf32>
    %59 = vector.extract_strided_slice %58 {offsets = [2, 0], sizes = [1, 128], strides = [1, 1]} : vector<3x128xf32> to vector<1x128xf32>
    %60 = tpu.iota {dimensions = array<i32: 1>} : vector<1x128xi32>
    %c16_i32_29 = arith.constant 16 : i32
    %c0_i32_30 = arith.constant 0 : i32
    %61 = arith.cmpi eq, %c16_i32_29, %c0_i32_30 : i32
    %c1_i32_31 = arith.constant 1 : i32
    %62 = arith.select %61, %c1_i32_31, %c16_i32_29 : i32
    %63 = vector.broadcast %62 : i32 to vector<1x128xi32>
    %64 = arith.remsi %60, %63 : vector<1x128xi32>
    %c0_i32_32 = arith.constant 0 : i32
    %65 = vector.broadcast %c0_i32_32 : i32 to vector<1x128xi32>
    %66 = arith.cmpi ne, %64, %65 : vector<1x128xi32>
    %c0_i32_33 = arith.constant 0 : i32
    %67 = vector.broadcast %c0_i32_33 : i32 to vector<1x128xi32>
    %68 = arith.cmpi slt, %64, %67 : vector<1x128xi32>
    %c0_i32_34 = arith.constant 0 : i32
    %69 = arith.cmpi slt, %62, %c0_i32_34 : i32
    %70 = vector.broadcast %69 : i1 to vector<1x128xi1>
    %71 = vector.broadcast %70 : vector<1x128xi1> to vector<1x128xi1>
    %72 = arith.xori %68, %71 : vector<1x128xi1>
    %73 = arith.andi %72, %66 : vector<1x128xi1>
    %74 = vector.broadcast %62 : i32 to vector<1x128xi32>
    %75 = arith.addi %64, %74 : vector<1x128xi32>
    %76 = arith.select %73, %75, %64 : vector<1x128xi1>, vector<1x128xi32>
    %c0_i32_35 = arith.constant 0 : i32
    %77 = vector.broadcast %c0_i32_35 : i32 to vector<1x128xi32>
    %78 = arith.cmpi eq, %76, %77 : vector<1x128xi32>
    %cst_36 = arith.constant 0.000000e+00 : f32
    %79 = vector.broadcast %cst_36 : f32 to vector<1x128xf32>
    %80 = arith.select %78, %79, %53 : vector<1x128xi1>, vector<1x128xf32>
    %c15_i32_37 = arith.constant 15 : i32
    %81 = vector.broadcast %c15_i32_37 : i32 to vector<1x128xi32>
    %82 = arith.cmpi eq, %76, %81 : vector<1x128xi32>
    %cst_38 = arith.constant 0.000000e+00 : f32
    %83 = vector.broadcast %cst_38 : f32 to vector<1x128xf32>
    %84 = arith.select %82, %83, %59 : vector<1x128xi1>, vector<1x128xf32>
    %85 = arith.addf %80, %56 : vector<1x128xf32>
    %86 = arith.addf %85, %84 : vector<1x128xf32>
    %c0_39 = arith.constant 0 : index
    %87 = memref.load %arg5[%c0_39] : memref<1xf32, #tpu.memory_space<smem>>
    %88 = vector.broadcast %87 : f32 to vector<1x128xf32>
    %89 = arith.addf %86, %88 : vector<1x128xf32>
    %90 = vector.shape_cast %89 : vector<1x128xf32> to vector<1x1x128xf32>
    %c0_40 = arith.constant 0 : index
    %c0_41 = arith.constant 0 : index
    %c0_42 = arith.constant 0 : index
    %91 = vector.load %arg6[%c0_40, %c0_41, %c0_42] : memref<1x1x128xf32, #tpu.memory_space<vmem>>, vector<1x1x128xf32>
    tpu.vector_store %arg6[%c0_40, %c0_41, %c0_42], %90 {strides = array<i32>} : memref<1x1x128xf32, #tpu.memory_space<vmem>>, vector<1x1x128xf32>,
    return
  }
  func.func @transform_0(%arg0: i32) -> (i32, i32) {
    %c0_i32 = arith.constant 0 : i32
    %c0_i32_0 = arith.constant 0 : i32
    return %arg0, %c0_i32 : i32, i32
  }
  func.func @transform_1(%arg0: i32) -> (i32, i32) {
    %c0_i32 = arith.constant 0 : i32
    %c0_i32_0 = arith.constant 0 : i32
    %c0_i32_1 = arith.constant 0 : i32
    return %c0_i32, %c0_i32_0 : i32, i32
  }
  func.func @transform_2(%arg0: i32) -> (i32, i32) {
    %c0_i32 = arith.constant 0 : i32
    %c0_i32_0 = arith.constant 0 : i32
    %c0_i32_1 = arith.constant 0 : i32
    return %c0_i32, %c0_i32_0 : i32, i32
  }
  func.func @transform_3(%arg0: i32) -> (i32, i32) {
    %c0_i32 = arith.constant 0 : i32
    %c0_i32_0 = arith.constant 0 : i32
    %c0_i32_1 = arith.constant 0 : i32
    return %c0_i32, %c0_i32_0 : i32, i32
  }
  func.func @transform_4(%arg0: i32) -> i32 {
    %c0_i32 = arith.constant 0 : i32
    %c0_i32_0 = arith.constant 0 : i32
    return %c0_i32 : i32
  }
  func.func @transform_5(%arg0: i32) -> (i32, i32, i32) {
    %c0_i32 = arith.constant 0 : i32
    %c0_i32_0 = arith.constant 0 : i32
    %c0_i32_1 = arith.constant 0 : i32
    return %arg0, %c0_i32, %c0_i32_0 : i32, i32, i32
  }
}

</mosaic_0001>

<llo_original>
// kernel: tpu_custom_call.1
$region0: #{tpu_custom_call.1}
  #allocation0 [shape = 'u32[]', space=smem, size = 0x4, offset = 0x4, fixed_abs, tag = 'smem constant byte address 0x4 - core index']
  #allocation1 [shape = 'u32[144,128]{1,0:T(1,128)}', space=vmem, size = 0x12000, scoped, tag = 'internal scratch']
  #allocation2 [shape = 'f32[128,384]{1,0:T(8,128)}', space=vmem, size = 0x30000, scoped, tag = 'scratch operand']
  #allocation3 [shape = 'f32[1]{0:T(128)S(6)}', space=smem, size = 0x200, scoped, tag = 'scoped memory for tpu_custom_call.1']
  %s0 = inlined_call_operand.hbm [shape: f32[128,128], index: 0, kind: input, shape index: {}]
  %s1 = inlined_call_operand.hbm [shape: f32[384,256], index: 1, kind: input, shape index: {}]
  %s2 = inlined_call_operand.vmem [shape: f32[1,256], index: 2, kind: input, shape index: {}]
  %s3 = inlined_call_operand.vmem [shape: f32[3,256], index: 3, kind: input, shape index: {}]
  %s4 = inlined_call_operand.<no memory space> [shape: f32[1], index: 4, kind: input, shape index: {}]
  %s5 = inlined_call_operand.hbm [shape: f32[1,1,128], index: 5, kind: output, shape index: {}]
  %s6 = sld [smem:[#allocation0]]
  $region38: #{tpu_custom_call.1} parent=0
    _
  %s8 = ssub.s32 1, %s6
  %s9 = scalar_select 0, %s8, %s6
  %10 = sst [smem:[#allocation3]] %s4
  $region1: #{tpu_custom_call.1} parent=0
    #allocation4 [shape = 'u8[65536]{0}', space=vmem, size = 0x10000, scoped, tag = 'input window, operand 0, single buffered']
    #allocation5 [shape = 's32[1]{0}', space=sflag, size = 0x4, scoped, tag = 'scoped memory for tpu_custom_call.1']
    #allocation6 [shape = 's32[1]{0}', space=sflag, size = 0x4, scoped, tag = 'scoped memory for tpu_custom_call.1']
    #allocation7 [shape = 'u8[393216]{0}', space=vmem, size = 0x60000, scoped, tag = 'input window, operand 1, single buffered']
    #allocation8 [shape = 's32[1]{0}', space=sflag, size = 0x4, scoped, tag = 'scoped memory for tpu_custom_call.1']
    #allocation9 [shape = 'u8[512]{0}', space=vmem, size = 0x400, scoped, tag = 'output window, operand 0, single buffered']
    %11 = vsyncpa [#allocation5], 0
    %12 = vsyncpa [#allocation8], 0
    %13 = vsyncpa [#allocation6], 0
    // Predicated region
    $region2: #{tpu_custom_call.1} parent=1 // pred_check
      _
    $region3: #{tpu_custom_call.1} parent=1 // pred_check_branch
      %15 = sbr.rel (0) target = $region5
    $region4: #{tpu_custom_call.1} parent=1 // pred_region
      %s17 = ssub.s32 2048, 2048
      %18 = vsyncadd [#allocation5], %s17
      %s19 = sshll.u32 [#allocation4], 4
      %s20 = int_to_ptr.vmem [resolvable:$true] %s19
      %25 = dma.hbm_to_vmem [thread:$0]  %s0, 2048, %s20, [#allocation5], 128, 128, 8
    $region5: #{tpu_custom_call.1} parent=1 // pred_fallthru
      _
    // Predicated region
    $region6: #{tpu_custom_call.1} parent=1 // pred_check
      _
    $region7: #{tpu_custom_call.1} parent=1 // pred_check_branch
      %27 = sbr.rel (0) target = $region9
    $region8: #{tpu_custom_call.1} parent=1 // pred_region
      %s29 = ssub.s32 12288, 12288
      %30 = vsyncadd [#allocation8], %s29
      %s31 = sshll.u32 [#allocation7], 4
      %s32 = int_to_ptr.vmem [resolvable:$true] %s31
      %37 = dma.hbm_to_vmem [thread:$0]  %s1, 12288, %s32, [#allocation8], 256, 256, 16
    $region9: #{tpu_custom_call.1} parent=1 // pred_fallthru
      _
    // Predicated region
    $region10: #{tpu_custom_call.1} parent=1 // pred_check
      _
    $region11: #{tpu_custom_call.1} parent=1 // pred_check_branch
      %39 = sbr.rel (0) target = $region13
    $region12: #{tpu_custom_call.1} parent=1 // pred_region
      _
    $region13: #{tpu_custom_call.1} parent=1 // pred_fallthru
      _
    // Predicated region
    $region14: #{tpu_custom_call.1} parent=1 // pred_check
      _
    $region15: #{tpu_custom_call.1} parent=1 // pred_check_branch
      %41 = sbr.rel (0) target = $region17
    $region16: #{tpu_custom_call.1} parent=1 // pred_region
      _
    $region17: #{tpu_custom_call.1} parent=1 // pred_fallthru
      _
    // Predicated region
    $region18: #{tpu_custom_call.1} parent=1 // pred_check
      _
    $region19: #{tpu_custom_call.1} parent=1 // pred_check_branch
      %43 = sbr.rel (0) target = $region21
    $region20: #{tpu_custom_call.1} parent=1 // pred_region
      _
    $region21: #{tpu_custom_call.1} parent=1 // pred_fallthru
      _
    // Predicated region
    $region22: #{tpu_custom_call.1} parent=1 // pred_check
      _
    $region23: #{tpu_custom_call.1} parent=1 // pred_check_branch
      %45 = sbr.rel (0) target = $region25
    $region24: #{tpu_custom_call.1} parent=1 // pred_region
      %46 = dma.done [#allocation5], 2048
    $region25: #{tpu_custom_call.1} parent=1 // pred_fallthru
      _
    // Predicated region
    $region26: #{tpu_custom_call.1} parent=1 // pred_check
      _
    $region27: #{tpu_custom_call.1} parent=1 // pred_check_branch
      %48 = sbr.rel (0) target = $region29
    $region28: #{tpu_custom_call.1} parent=1 // pred_region
      %49 = dma.done [#allocation8], 12288
    $region29: #{tpu_custom_call.1} parent=1 // pred_fallthru
      _
    %v50 = vld [vmem:[#allocation4] sm:$0xff]
    %v51 = vld [vmem:[#allocation4 + $0x8] sm:$0xff]
    %v52 = vld [vmem:[#allocation4 + $0x10] sm:$0xff]
    %v53 = vld [vmem:[#allocation4 + $0x18] sm:$0xff]
    %v54 = vld [vmem:[#allocation4 + $0x20] sm:$0xff]
    %v55 = vld [vmem:[#allocation4 + $0x28] sm:$0xff]
    %v56 = vld [vmem:[#allocation4 + $0x30] sm:$0xff]
    %v57 = vld [vmem:[#allocation4 + $0x38] sm:$0xff]
    %v58 = vld [vmem:[#allocation4 + $0x40] sm:$0xff]
    %v59 = vld [vmem:[#allocation4 + $0x48] sm:$0xff]
    %v60 = vld [vmem:[#allocation4 + $0x50] sm:$0xff]
    %v61 = vld [vmem:[#allocation4 + $0x58] sm:$0xff]
    %v62 = vld [vmem:[#allocation4 + $0x60] sm:$0xff]
    %v63 = vld [vmem:[#allocation4 + $0x68] sm:$0xff]
    %v64 = vld [vmem:[#allocation4 + $0x70] sm:$0xff]
    %v65 = vld [vmem:[#allocation4 + $0x78] sm:$0xff]
    %v66 = vlaneseq
    %v67 = vshrl.u32 %v66, 7
    %v68 = vadd.s32 %v67, 8
    %v69 = vadd.s32 %v67, 16
    %v70 = vadd.s32 %v67, 24
    %v71 = vadd.s32 %v67, 32
    %v72 = vadd.s32 %v67, 40
    %v73 = vadd.s32 %v67, 48
    %v74 = vadd.s32 %v67, 56
    %v75 = vadd.s32 %v67, 64
    %v76 = vadd.s32 %v67, 72
    %v77 = vadd.s32 %v67, 80
    %v78 = vadd.s32 %v67, 88
    %v79 = vadd.s32 %v67, 96
    %v80 = vadd.s32 %v67, 104
    %v81 = vadd.s32 %v67, 112
    %v82 = vadd.s32 %v67, 120
    %vm83 = vcmp.lt.s32.totalorder %v67, 0
    %v84 = vsub.s32 0, %v67
    %v85 = vsel %vm83, %v84, %v67
    %v86 = vshrl.u32 %v85, 4
    %v87 = vand.u32 %v85, 15
    %v88 = vsub.s32 0, %v87
    %v89 = vsel %vm83, %v88, %v87
    %vm90 = vcmp.lt.s32.totalorder %v68, 0
    %v91 = vsub.s32 0, %v68
    %v92 = vsel %vm90, %v91, %v68
    %v93 = vshrl.u32 %v92, 4
    %v94 = vand.u32 %v92, 15
    %v95 = vsub.s32 0, %v94
    %v96 = vsel %vm90, %v95, %v94
    %vm97 = vcmp.lt.s32.totalorder %v69, 0
    %v98 = vsub.s32 0, %v69
    %v99 = vsel %vm97, %v98, %v69
    %v100 = vshrl.u32 %v99, 4
    %v101 = vand.u32 %v99, 15
    %v102 = vsub.s32 0, %v101
    %v103 = vsel %vm97, %v102, %v101
    %vm104 = vcmp.lt.s32.totalorder %v70, 0
    %v105 = vsub.s32 0, %v70
    %v106 = vsel %vm104, %v105, %v70
    %v107 = vshrl.u32 %v106, 4
    %v108 = vand.u32 %v106, 15
    %v109 = vsub.s32 0, %v108
    %v110 = vsel %vm104, %v109, %v108
    %vm111 = vcmp.lt.s32.totalorder %v71, 0
    %v112 = vsub.s32 0, %v71
    %v113 = vsel %vm111, %v112, %v71
    %v114 = vshrl.u32 %v113, 4
    %v115 = vand.u32 %v113, 15
    %v116 = vsub.s32 0, %v115
    %v117 = vsel %vm111, %v116, %v115
    %vm118 = vcmp.lt.s32.totalorder %v72, 0
    %v119 = vsub.s32 0, %v72
    %v120 = vsel %vm118, %v119, %v72
    %v121 = vshrl.u32 %v120, 4
    %v122 = vand.u32 %v120, 15
    %v123 = vsub.s32 0, %v122
    %v124 = vsel %vm118, %v123, %v122
    %vm125 = vcmp.lt.s32.totalorder %v73, 0
    %v126 = vsub.s32 0, %v73
    %v127 = vsel %vm125, %v126, %v73
    %v128 = vshrl.u32 %v127, 4
    %v129 = vand.u32 %v127, 15
    %v130 = vsub.s32 0, %v129
    %v131 = vsel %vm125, %v130, %v129
    %vm132 = vcmp.lt.s32.totalorder %v74, 0
    %v133 = vsub.s32 0, %v74
    %v134 = vsel %vm132, %v133, %v74
    %v135 = vshrl.u32 %v134, 4
    %v136 = vand.u32 %v134, 15
    %v137 = vsub.s32 0, %v136
    %v138 = vsel %vm132, %v137, %v136
    %vm139 = vcmp.lt.s32.totalorder %v75, 0
    %v140 = vsub.s32 0, %v75
    %v141 = vsel %vm139, %v140, %v75
    %v142 = vshrl.u32 %v141, 4
    %v143 = vand.u32 %v141, 15
    %v144 = vsub.s32 0, %v143
    %v145 = vsel %vm139, %v144, %v143
    %vm146 = vcmp.lt.s32.totalorder %v76, 0
    %v147 = vsub.s32 0, %v76
    %v148 = vsel %vm146, %v147, %v76
    %v149 = vshrl.u32 %v148, 4
    %v150 = vand.u32 %v148, 15
    %v151 = vsub.s32 0, %v150
    %v152 = vsel %vm146, %v151, %v150
    %vm153 = vcmp.lt.s32.totalorder %v77, 0
    %v154 = vsub.s32 0, %v77
    %v155 = vsel %vm153, %v154, %v77
    %v156 = vshrl.u32 %v155, 4
    %v157 = vand.u32 %v155, 15
    %v158 = vsub.s32 0, %v157
    %v159 = vsel %vm153, %v158, %v157
    %vm160 = vcmp.lt.s32.totalorder %v78, 0
    %v161 = vsub.s32 0, %v78
    %v162 = vsel %vm160, %v161, %v78
    %v163 = vshrl.u32 %v162, 4
    %v164 = vand.u32 %v162, 15
    %v165 = vsub.s32 0, %v164
    %v166 = vsel %vm160, %v165, %v164
    %vm167 = vcmp.lt.s32.totalorder %v79, 0
    %v168 = vsub.s32 0, %v79
    %v169 = vsel %vm167, %v168, %v79
    %v170 = vshrl.u32 %v169, 4
    %v171 = vand.u32 %v169, 15
    %v172 = vsub.s32 0, %v171
    %v173 = vsel %vm167, %v172, %v171
    %vm174 = vcmp.lt.s32.totalorder %v80, 0
    %v175 = vsub.s32 0, %v80
    %v176 = vsel %vm174, %v175, %v80
    %v177 = vshrl.u32 %v176, 4
    %v178 = vand.u32 %v176, 15
    %v179 = vsub.s32 0, %v178
    %v180 = vsel %vm174, %v179, %v178
    %vm181 = vcmp.lt.s32.totalorder %v81, 0
    %v182 = vsub.s32 0, %v81
    %v183 = vsel %vm181, %v182, %v81
    %v184 = vshrl.u32 %v183, 4
    %v185 = vand.u32 %v183, 15
    %v186 = vsub.s32 0, %v185
    %v187 = vsel %vm181, %v186, %v185
    %vm188 = vcmp.lt.s32.totalorder %v82, 0
    %v189 = vsub.s32 0, %v82
    %v190 = vsel %vm188, %v189, %v82
    %v191 = vshrl.u32 %v190, 4
    %v192 = vand.u32 %v190, 15
    %v193 = vsub.s32 0, %v192
    %v194 = vsel %vm188, %v193, %v192
    %vm195 = vcmp.ne.s32.totalorder %v89, 0
    %vm196 = vcmp.ne.s32.totalorder %v96, 0
    %vm197 = vcmp.ne.s32.totalorder %v103, 0
    %vm198 = vcmp.ne.s32.totalorder %v110, 0
    %vm199 = vcmp.ne.s32.totalorder %v117, 0
    %vm200 = vcmp.ne.s32.totalorder %v124, 0
    %vm201 = vcmp.ne.s32.totalorder %v131, 0
    %vm202 = vcmp.ne.s32.totalorder %v138, 0
    %vm203 = vcmp.ne.s32.totalorder %v145, 0
    %vm204 = vcmp.ne.s32.totalorder %v152, 0
    %vm205 = vcmp.ne.s32.totalorder %v159, 0
    %vm206 = vcmp.ne.s32.totalorder %v166, 0
    %vm207 = vcmp.ne.s32.totalorder %v173, 0
    %vm208 = vcmp.ne.s32.totalorder %v180, 0
    %vm209 = vcmp.ne.s32.totalorder %v187, 0
    %vm210 = vcmp.ne.s32.totalorder %v194, 0
    %vm211 = vcmp.lt.s32.totalorder %v89, 0
    %vm212 = vcmp.lt.s32.totalorder %v96, 0
    %vm213 = vcmp.lt.s32.totalorder %v103, 0
    %vm214 = vcmp.lt.s32.totalorder %v110, 0
    %vm215 = vcmp.lt.s32.totalorder %v117, 0
    %vm216 = vcmp.lt.s32.totalorder %v124, 0
    %vm217 = vcmp.lt.s32.totalorder %v131, 0
    %vm218 = vcmp.lt.s32.totalorder %v138, 0
    %vm219 = vcmp.lt.s32.totalorder %v145, 0
    %vm220 = vcmp.lt.s32.totalorder %v152, 0
    %vm221 = vcmp.lt.s32.totalorder %v159, 0
    %vm222 = vcmp.lt.s32.totalorder %v166, 0
    %vm223 = vcmp.lt.s32.totalorder %v173, 0
    %vm224 = vcmp.lt.s32.totalorder %v180, 0
    %vm225 = vcmp.lt.s32.totalorder %v187, 0
    %vm226 = vcmp.lt.s32.totalorder %v194, 0
    %vm227 = vmand %vm211, %vm195
    %vm228 = vmand %vm212, %vm196
    %vm229 = vmand %vm213, %vm197
    %vm230 = vmand %vm214, %vm198
    %vm231 = vmand %vm215, %vm199
    %vm232 = vmand %vm216, %vm200
    %vm233 = vmand %vm217, %vm201
    %vm234 = vmand %vm218, %vm202
    %vm235 = vmand %vm219, %vm203
    %vm236 = vmand %vm220, %vm204
    %vm237 = vmand %vm221, %vm205
    %vm238 = vmand %vm222, %vm206
    %vm239 = vmand %vm223, %vm207
    %vm240 = vmand %vm224, %vm208
    %vm241 = vmand %vm225, %vm209
    %vm242 = vmand %vm226, %vm210
    %v243 = vadd.s32 %v89, 16
    %v244 = vadd.s32 %v96, 16
    %v245 = vadd.s32 %v103, 16
    %v246 = vadd.s32 %v110, 16
    %v247 = vadd.s32 %v117, 16
    %v248 = vadd.s32 %v124, 16
    %v249 = vadd.s32 %v131, 16
    %v250 = vadd.s32 %v138, 16
    %v251 = vadd.s32 %v145, 16
    %v252 = vadd.s32 %v152, 16
    %v253 = vadd.s32 %v159, 16
    %v254 = vadd.s32 %v166, 16
    %v255 = vadd.s32 %v173, 16
    %v256 = vadd.s32 %v180, 16
    %v257 = vadd.s32 %v187, 16
    %v258 = vadd.s32 %v194, 16
    %v259 = vsel %vm227, %v243, %v89
    %v260 = vsel %vm228, %v244, %v96
    %v261 = vsel %vm229, %v245, %v103
    %v262 = vsel %vm230, %v246, %v110
    %v263 = vsel %vm231, %v247, %v117
    %v264 = vsel %vm232, %v248, %v124
    %v265 = vsel %vm233, %v249, %v131
    %v266 = vsel %vm234, %v250, %v138
    %v267 = vsel %vm235, %v251, %v145
    %v268 = vsel %vm236, %v252, %v152
    %v269 = vsel %vm237, %v253, %v159
    %v270 = vsel %vm238, %v254, %v166
    %v271 = vsel %vm239, %v255, %v173
    %v272 = vsel %vm240, %v256, %v180
    %v273 = vsel %vm241, %v257, %v187
    %v274 = vsel %vm242, %v258, %v194
    %vm291 = vcmask 1040384
    %v292 = vrot.slane %v50, 7
    %v293 = vrot.slane %v51, 7
    %v294 = vsel %vm291, %v292, %v293
    %v295 = vrot.slane %v52, 7
    %v296 = vsel %vm291, %v293, %v295
    %v297 = vrot.slane %v53, 7
    %v298 = vsel %vm291, %v295, %v297
    %v299 = vrot.slane %v54, 7
    %v300 = vsel %vm291, %v297, %v299
    %v301 = vrot.slane %v55, 7
    %v302 = vsel %vm291, %v299, %v301
    %v303 = vrot.slane %v56, 7
    %v304 = vsel %vm291, %v301, %v303
    %v305 = vrot.slane %v57, 7
    %v306 = vsel %vm291, %v303, %v305
    %v307 = vrot.slane %v58, 7
    %v308 = vsel %vm291, %v305, %v307
    %v309 = vrot.slane %v59, 7
    %v310 = vsel %vm291, %v307, %v309
    %v311 = vrot.slane %v60, 7
    %v312 = vsel %vm291, %v309, %v311
    %v313 = vrot.slane %v61, 7
    %v314 = vsel %vm291, %v311, %v313
    %v315 = vrot.slane %v62, 7
    %v316 = vsel %vm291, %v313, %v315
    %v317 = vrot.slane %v63, 7
    %v318 = vsel %vm291, %v315, %v317
    %v319 = vrot.slane %v64, 7
    %v320 = vsel %vm291, %v317, %v319
    %v321 = vrot.slane %v65, 7
    %v322 = vsel %vm291, %v319, %v321
    %v339 = vsel %vm291, 0.0, %v292
    %vm340 = vcmask 1046528
    %v341 = vrot.slane %v50, 1
    %v342 = vrot.slane %v51, 1
    %v343 = vsel %vm340, %v341, %v342
    %v344 = vrot.slane %v52, 1
    %v345 = vsel %vm340, %v342, %v344
    %v346 = vrot.slane %v53, 1
    %v347 = vsel %vm340, %v344, %v346
    %v348 = vrot.slane %v54, 1
    %v349 = vsel %vm340, %v346, %v348
    %v350 = vrot.slane %v55, 1
    %v351 = vsel %vm340, %v348, %v350
    %v352 = vrot.slane %v56, 1
    %v353 = vsel %vm340, %v350, %v352
    %v354 = vrot.slane %v57, 1
    %v355 = vsel %vm340, %v352, %v354
    %v356 = vrot.slane %v58, 1
    %v357 = vsel %vm340, %v354, %v356
    %v358 = vrot.slane %v59, 1
    %v359 = vsel %vm340, %v356, %v358
    %v360 = vrot.slane %v60, 1
    %v361 = vsel %vm340, %v358, %v360
    %v362 = vrot.slane %v61, 1
    %v363 = vsel %vm340, %v360, %v362
    %v364 = vrot.slane %v62, 1
    %v365 = vsel %vm340, %v362, %v364
    %v366 = vrot.slane %v63, 1
    %v367 = vsel %vm340, %v364, %v366
    %v368 = vrot.slane %v64, 1
    %v369 = vsel %vm340, %v366, %v368
    %v370 = vrot.slane %v65, 1
    %v371 = vsel %vm340, %v368, %v370
    %v388 = vsel %vm340, %v370, 0.0
    %vm389 = vcmp.eq.s32.totalorder %v259, 0
    %vm390 = vcmp.eq.s32.totalorder %v260, 0
    %vm391 = vcmp.eq.s32.totalorder %v261, 0
    %vm392 = vcmp.eq.s32.totalorder %v262, 0
    %vm393 = vcmp.eq.s32.totalorder %v263, 0
    %vm394 = vcmp.eq.s32.totalorder %v264, 0
    %vm395 = vcmp.eq.s32.totalorder %v265, 0
    %vm396 = vcmp.eq.s32.totalorder %v266, 0
    %vm397 = vcmp.eq.s32.totalorder %v267, 0
    %vm398 = vcmp.eq.s32.totalorder %v268, 0
    %vm399 = vcmp.eq.s32.totalorder %v269, 0
    %vm400 = vcmp.eq.s32.totalorder %v270, 0
    %vm401 = vcmp.eq.s32.totalorder %v271, 0
    %vm402 = vcmp.eq.s32.totalorder %v272, 0
    %vm403 = vcmp.eq.s32.totalorder %v273, 0
    %vm404 = vcmp.eq.s32.totalorder %v274, 0
    %v405 = vsel %vm389, 1, 0
    %v406 = vsel %vm390, 1, 0
    %v407 = vsel %vm391, 1, 0
    %v408 = vsel %vm392, 1, 0
    %v409 = vsel %vm393, 1, 0
    %v410 = vsel %vm394, 1, 0
    %v411 = vsel %vm395, 1, 0
    %v412 = vsel %vm396, 1, 0
    %v413 = vsel %vm397, 1, 0
    %v414 = vsel %vm398, 1, 0
    %v415 = vsel %vm399, 1, 0
    %v416 = vsel %vm400, 1, 0
    %v417 = vsel %vm401, 1, 0
    %v418 = vsel %vm402, 1, 0
    %v419 = vsel %vm403, 1, 0
    %v420 = vsel %vm404, 1, 0
    %vm421 = vcmp.eq.s32.totalorder %v405, 1
    %vm422 = vcmp.eq.s32.totalorder %v406, 1
    %vm423 = vcmp.eq.s32.totalorder %v407, 1
    %vm424 = vcmp.eq.s32.totalorder %v408, 1
    %vm425 = vcmp.eq.s32.totalorder %v409, 1
    %vm426 = vcmp.eq.s32.totalorder %v410, 1
    %vm427 = vcmp.eq.s32.totalorder %v411, 1
    %vm428 = vcmp.eq.s32.totalorder %v412, 1
    %vm429 = vcmp.eq.s32.totalorder %v413, 1
    %vm430 = vcmp.eq.s32.totalorder %v414, 1
    %vm431 = vcmp.eq.s32.totalorder %v415, 1
    %vm432 = vcmp.eq.s32.totalorder %v416, 1
    %vm433 = vcmp.eq.s32.totalorder %v417, 1
    %vm434 = vcmp.eq.s32.totalorder %v418, 1
    %vm435 = vcmp.eq.s32.totalorder %v419, 1
    %vm436 = vcmp.eq.s32.totalorder %v420, 1
    %v437 = vsel %vm421, 0.0, %v339
    %v438 = vsel %vm422, 0.0, %v294
    %v439 = vsel %vm423, 0.0, %v296
    %v440 = vsel %vm424, 0.0, %v298
    %v441 = vsel %vm425, 0.0, %v300
    %v442 = vsel %vm426, 0.0, %v302
    %v443 = vsel %vm427, 0.0, %v304
    %v444 = vsel %vm428, 0.0, %v306
    %v445 = vsel %vm429, 0.0, %v308
    %v446 = vsel %vm430, 0.0, %v310
    %v447 = vsel %vm431, 0.0, %v312
    %v448 = vsel %vm432, 0.0, %v314
    %v449 = vsel %vm433, 0.0, %v316
    %v450 = vsel %vm434, 0.0, %v318
    %v451 = vsel %vm435, 0.0, %v320
    %v452 = vsel %vm436, 0.0, %v322
    %453 = vst [vmem:[#allocation2] sm:$0xff] %v437
    %454 = vst [vmem:[#allocation2 + $0x18] sm:$0xff] %v438
    %455 = vst [vmem:[#allocation2 + $0x30] sm:$0xff] %v439
    %456 = vst [vmem:[#allocation2 + $0x48] sm:$0xff] %v440
    %457 = vst [vmem:[#allocation2 + $0x60] sm:$0xff] %v441
    %458 = vst [vmem:[#allocation2 + $0x78] sm:$0xff] %v442
    %459 = vst [vmem:[#allocation2 + $0x90] sm:$0xff] %v443
    %460 = vst [vmem:[#allocation2 + $0xa8] sm:$0xff] %v444
    %461 = vst [vmem:[#allocation2 + $0xc0] sm:$0xff] %v445
    %462 = vst [vmem:[#allocation2 + $0xd8] sm:$0xff] %v446
    %463 = vst [vmem:[#allocation2 + $0xf0] sm:$0xff] %v447
    %464 = vst [vmem:[#allocation2 + $0x108] sm:$0xff] %v448
    %465 = vst [vmem:[#allocation2 + $0x120] sm:$0xff] %v449
    %466 = vst [vmem:[#allocation2 + $0x138] sm:$0xff] %v450
    %467 = vst [vmem:[#allocation2 + $0x150] sm:$0xff] %v451
    %468 = vst [vmem:[#allocation2 + $0x168] sm:$0xff] %v452
    %469 = vst [vmem:[#allocation2 + $0x8] sm:$0xff] %v50
    %470 = vst [vmem:[#allocation2 + $0x20] sm:$0xff] %v51
    %471 = vst [vmem:[#allocation2 + $0x38] sm:$0xff] %v52
    %472 = vst [vmem:[#allocation2 + $0x50] sm:$0xff] %v53
    %473 = vst [vmem:[#allocation2 + $0x68] sm:$0xff] %v54
    %474 = vst [vmem:[#allocation2 + $0x80] sm:$0xff] %v55
    %475 = vst [vmem:[#allocation2 + $0x98] sm:$0xff] %v56
    %476 = vst [vmem:[#allocation2 + $0xb0] sm:$0xff] %v57
    %477 = vst [vmem:[#allocation2 + $0xc8] sm:$0xff] %v58
    %478 = vst [vmem:[#allocation2 + $0xe0] sm:$0xff] %v59
    %479 = vst [vmem:[#allocation2 + $0xf8] sm:$0xff] %v60
    %480 = vst [vmem:[#allocation2 + $0x110] sm:$0xff] %v61
    %481 = vst [vmem:[#allocation2 + $0x128] sm:$0xff] %v62
    %482 = vst [vmem:[#allocation2 + $0x140] sm:$0xff] %v63
    %483 = vst [vmem:[#allocation2 + $0x158] sm:$0xff] %v64
    %484 = vst [vmem:[#allocation2 + $0x170] sm:$0xff] %v65
    %vm485 = vcmp.eq.s32.totalorder %v259, 15
    %vm486 = vcmp.eq.s32.totalorder %v260, 15
    %vm487 = vcmp.eq.s32.totalorder %v261, 15
    %vm488 = vcmp.eq.s32.totalorder %v262, 15
    %vm489 = vcmp.eq.s32.totalorder %v263, 15
    %vm490 = vcmp.eq.s32.totalorder %v264, 15
    %vm491 = vcmp.eq.s32.totalorder %v265, 15
    %vm492 = vcmp.eq.s32.totalorder %v266, 15
    %vm493 = vcmp.eq.s32.totalorder %v267, 15
    %vm494 = vcmp.eq.s32.totalorder %v268, 15
    %vm495 = vcmp.eq.s32.totalorder %v269, 15
    %vm496 = vcmp.eq.s32.totalorder %v270, 15
    %vm497 = vcmp.eq.s32.totalorder %v271, 15
    %vm498 = vcmp.eq.s32.totalorder %v272, 15
    %vm499 = vcmp.eq.s32.totalorder %v273, 15
    %vm500 = vcmp.eq.s32.totalorder %v274, 15
    %v501 = vsel %vm485, 1, 0
    %v502 = vsel %vm486, 1, 0
    %v503 = vsel %vm487, 1, 0
    %v504 = vsel %vm488, 1, 0
    %v505 = vsel %vm489, 1, 0
    %v506 = vsel %vm490, 1, 0
    %v507 = vsel %vm491, 1, 0
    %v508 = vsel %vm492, 1, 0
    %v509 = vsel %vm493, 1, 0
    %v510 = vsel %vm494, 1, 0
    %v511 = vsel %vm495, 1, 0
    %v512 = vsel %vm496, 1, 0
    %v513 = vsel %vm497, 1, 0
    %v514 = vsel %vm498, 1, 0
    %v515 = vsel %vm499, 1, 0
    %v516 = vsel %vm500, 1, 0
    %vm517 = vcmp.eq.s32.totalorder %v501, 1
    %vm518 = vcmp.eq.s32.totalorder %v502, 1
    %vm519 = vcmp.eq.s32.totalorder %v503, 1
    %vm520 = vcmp.eq.s32.totalorder %v504, 1
    %vm521 = vcmp.eq.s32.totalorder %v505, 1
    %vm522 = vcmp.eq.s32.totalorder %v506, 1
    %vm523 = vcmp.eq.s32.totalorder %v507, 1
    %vm524 = vcmp.eq.s32.totalorder %v508, 1
    %vm525 = vcmp.eq.s32.totalorder %v509, 1
    %vm526 = vcmp.eq.s32.totalorder %v510, 1
    %vm527 = vcmp.eq.s32.totalorder %v511, 1
    %vm528 = vcmp.eq.s32.totalorder %v512, 1
    %vm529 = vcmp.eq.s32.totalorder %v513, 1
    %vm530 = vcmp.eq.s32.totalorder %v514, 1
    %vm531 = vcmp.eq.s32.totalorder %v515, 1
    %vm532 = vcmp.eq.s32.totalorder %v516, 1
    %v533 = vsel %vm517, 0.0, %v343
    %v534 = vsel %vm518, 0.0, %v345
    %v535 = vsel %vm519, 0.0, %v347
    %v536 = vsel %vm520, 0.0, %v349
    %v537 = vsel %vm521, 0.0, %v351
    %v538 = vsel %vm522, 0.0, %v353
    %v539 = vsel %vm523, 0.0, %v355
    %v540 = vsel %vm524, 0.0, %v357
    %v541 = vsel %vm525, 0.0, %v359
    %v542 = vsel %vm526, 0.0, %v361
    %v543 = vsel %vm527, 0.0, %v363
    %v544 = vsel %vm528, 0.0, %v365
    %v545 = vsel %vm529, 0.0, %v367
    %v546 = vsel %vm530, 0.0, %v369
    %v547 = vsel %vm531, 0.0, %v371
    %v548 = vsel %vm532, 0.0, %v388
    %549 = vst [vmem:[#allocation2 + $0x10] sm:$0xff] %v533
    %550 = vst [vmem:[#allocation2 + $0x28] sm:$0xff] %v534
    %551 = vst [vmem:[#allocation2 + $0x40] sm:$0xff] %v535
    %552 = vst [vmem:[#allocation2 + $0x58] sm:$0xff] %v536
    %553 = vst [vmem:[#allocation2 + $0x70] sm:$0xff] %v537
    %554 = vst [vmem:[#allocation2 + $0x88] sm:$0xff] %v538
    %555 = vst [vmem:[#allocation2 + $0xa0] sm:$0xff] %v539
    %556 = vst [vmem:[#allocation2 + $0xb8] sm:$0xff] %v540
    %557 = vst [vmem:[#allocation2 + $0xd0] sm:$0xff] %v541
    %558 = vst [vmem:[#allocation2 + $0xe8] sm:$0xff] %v542
    %559 = vst [vmem:[#allocation2 + $0x100] sm:$0xff] %v543
    %560 = vst [vmem:[#allocation2 + $0x118] sm:$0xff] %v544
    %561 = vst [vmem:[#allocation2 + $0x130] sm:$0xff] %v545
    %562 = vst [vmem:[#allocation2 + $0x148] sm:$0xff] %v546
    %563 = vst [vmem:[#allocation2 + $0x160] sm:$0xff] %v547
    %564 = vst [vmem:[#allocation2 + $0x178] sm:$0xff] %v548
    %v565 = vld [vmem:[#allocation2] sm:$0xff]
    %v566 = vld [vmem:[#allocation2 + $0x8] sm:$0xff]
    %v567 = vld [vmem:[#allocation2 + $0x10] sm:$0xff]
    %v568 = vld [vmem:[#allocation2 + $0x18] sm:$0xff]
    %v569 = vld [vmem:[#allocation2 + $0x20] sm:$0xff]
    %v570 = vld [vmem:[#allocation2 + $0x28] sm:$0xff]
    %v571 = vld [vmem:[#allocation2 + $0x30] sm:$0xff]
    %v572 = vld [vmem:[#allocation2 + $0x38] sm:$0xff]
    %v573 = vld [vmem:[#allocation2 + $0x40] sm:$0xff]
    %v574 = vld [vmem:[#allocation2 + $0x48] sm:$0xff]
    %v575 = vld [vmem:[#allocation2 + $0x50] sm:$0xff]
    %v576 = vld [vmem:[#allocation2 + $0x58] sm:$0xff]
    %v577 = vld [vmem:[#allocation2 + $0x60] sm:$0xff]
    %v578 = vld [vmem:[#allocation2 + $0x68] sm:$0xff]
    %v579 = vld [vmem:[#allocation2 + $0x70] sm:$0xff]
    %v580 = vld [vmem:[#allocation2 + $0x78] sm:$0xff]
    %v581 = vld [vmem:[#allocation2 + $0x80] sm:$0xff]
    %v582 = vld [vmem:[#allocation2 + $0x88] sm:$0xff]
    %v583 = vld [vmem:[#allocation2 + $0x90] sm:$0xff]
    %v584 = vld [vmem:[#allocation2 + $0x98] sm:$0xff]
    %v585 = vld [vmem:[#allocation2 + $0xa0] sm:$0xff]
    %v586 = vld [vmem:[#allocation2 + $0xa8] sm:$0xff]
    %v587 = vld [vmem:[#allocation2 + $0xb0] sm:$0xff]
    %v588 = vld [vmem:[#allocation2 + $0xb8] sm:$0xff]
    %v589 = vld [vmem:[#allocation2 + $0xc0] sm:$0xff]
    %v590 = vld [vmem:[#allocation2 + $0xc8] sm:$0xff]
    %v591 = vld [vmem:[#allocation2 + $0xd0] sm:$0xff]
    %v592 = vld [vmem:[#allocation2 + $0xd8] sm:$0xff]
    %v593 = vld [vmem:[#allocation2 + $0xe0] sm:$0xff]
    %v594 = vld [vmem:[#allocation2 + $0xe8] sm:$0xff]
    %v595 = vld [vmem:[#allocation2 + $0xf0] sm:$0xff]
    %v596 = vld [vmem:[#allocation2 + $0xf8] sm:$0xff]
    %v597 = vld [vmem:[#allocation2 + $0x100] sm:$0xff]
    %v598 = vld [vmem:[#allocation2 + $0x108] sm:$0xff]
    %v599 = vld [vmem:[#allocation2 + $0x110] sm:$0xff]
    %v600 = vld [vmem:[#allocation2 + $0x118] sm:$0xff]
    %v601 = vld [vmem:[#allocation2 + $0x120] sm:$0xff]
    %v602 = vld [vmem:[#allocation2 + $0x128] sm:$0xff]
    %v603 = vld [vmem:[#allocation2 + $0x130] sm:$0xff]
    %v604 = vld [vmem:[#allocation2 + $0x138] sm:$0xff]
    %v605 = vld [vmem:[#allocation2 + $0x140] sm:$0xff]
    %v606 = vld [vmem:[#allocation2 + $0x148] sm:$0xff]
    %v607 = vld [vmem:[#allocation2 + $0x150] sm:$0xff]
    %v608 = vld [vmem:[#allocation2 + $0x158] sm:$0xff]
    %v609 = vld [vmem:[#allocation2 + $0x160] sm:$0xff]
    %v610 = vld [vmem:[#allocation2 + $0x168] sm:$0xff]
    %v611 = vld [vmem:[#allocation2 + $0x170] sm:$0xff]
    %v612 = vld [vmem:[#allocation2 + $0x178] sm:$0xff]
    %v613 = vld [vmem:[#allocation7] sm:$0xff]
    %v614 = vld [vmem:[#allocation7 + $0x8] sm:$0xff]
    %v615 = vld [vmem:[#allocation7 + $0x10] sm:$0xff]
    %v616 = vld [vmem:[#allocation7 + $0x18] sm:$0xff]
    %v617 = vld [vmem:[#allocation7 + $0x20] sm:$0xff]
    %v618 = vld [vmem:[#allocation7 + $0x28] sm:$0xff]
    %v619 = vld [vmem:[#allocation7 + $0x30] sm:$0xff]
    %v620 = vld [vmem:[#allocation7 + $0x38] sm:$0xff]
    %v621 = vld [vmem:[#allocation7 + $0x40] sm:$0xff]
    %v622 = vld [vmem:[#allocation7 + $0x48] sm:$0xff]
    %v623 = vld [vmem:[#allocation7 + $0x50] sm:$0xff]
    %v624 = vld [vmem:[#allocation7 + $0x58] sm:$0xff]
    %v625 = vld [vmem:[#allocation7 + $0x60] sm:$0xff]
    %v626 = vld [vmem:[#allocation7 + $0x68] sm:$0xff]
    %v627 = vld [vmem:[#allocation7 + $0x70] sm:$0xff]
    %v628 = vld [vmem:[#allocation7 + $0x78] sm:$0xff]
    %v629 = vld [vmem:[#allocation7 + $0x80] sm:$0xff]
    %v630 = vld [vmem:[#allocation7 + $0x88] sm:$0xff]
    %v631 = vld [vmem:[#allocation7 + $0x90] sm:$0xff]
    %v632 = vld [vmem:[#allocation7 + $0x98] sm:$0xff]
    %v633 = vld [vmem:[#allocation7 + $0xa0] sm:$0xff]
    %v634 = vld [vmem:[#allocation7 + $0xa8] sm:$0xff]
    %v635 = vld [vmem:[#allocation7 + $0xb0] sm:$0xff]
    %v636 = vld [vmem:[#allocation7 + $0xb8] sm:$0xff]
    %v637 = vld [vmem:[#allocation7 + $0xc0] sm:$0xff]
    %v638 = vld [vmem:[#allocation7 + $0xc8] sm:$0xff]
    %v639 = vld [vmem:[#allocation7 + $0xd0] sm:$0xff]
    %v640 = vld [vmem:[#allocation7 + $0xd8] sm:$0xff]
    %v641 = vld [vmem:[#allocation7 + $0xe0] sm:$0xff]
    %v642 = vld [vmem:[#allocation7 + $0xe8] sm:$0xff]
    %v643 = vld [vmem:[#allocation7 + $0xf0] sm:$0xff]
    %v644 = vld [vmem:[#allocation7 + $0xf8] sm:$0xff]
    %v645 = vld [vmem:[#allocation7 + $0x100] sm:$0xff]
    %v646 = vld [vmem:[#allocation7 + $0x108] sm:$0xff]
    %v647 = vld [vmem:[#allocation7 + $0x110] sm:$0xff]
    %v648 = vld [vmem:[#allocation7 + $0x118] sm:$0xff]
    %v649 = vld [vmem:[#allocation7 + $0x120] sm:$0xff]
    %v650 = vld [vmem:[#allocation7 + $0x128] sm:$0xff]
    %v651 = vld [vmem:[#allocation7 + $0x130] sm:$0xff]
    %v652 = vld [vmem:[#allocation7 + $0x138] sm:$0xff]
    %v653 = vld [vmem:[#allocation7 + $0x140] sm:$0xff]
    %v654 = vld [vmem:[#allocation7 + $0x148] sm:$0xff]
    %v655 = vld [vmem:[#allocation7 + $0x150] sm:$0xff]
    %v656 = vld [vmem:[#allocation7 + $0x158] sm:$0xff]
    %v657 = vld [vmem:[#allocation7 + $0x160] sm:$0xff]
    %v658 = vld [vmem:[#allocation7 + $0x168] sm:$0xff]
    %v659 = vld [vmem:[#allocation7 + $0x170] sm:$0xff]
    %v660 = vld [vmem:[#allocation7 + $0x178] sm:$0xff]
    %v661 = vld [vmem:[#allocation7 + $0x180] sm:$0xff]
    %v662 = vld [vmem:[#allocation7 + $0x188] sm:$0xff]
    %v663 = vld [vmem:[#allocation7 + $0x190] sm:$0xff]
    %v664 = vld [vmem:[#allocation7 + $0x198] sm:$0xff]
    %v665 = vld [vmem:[#allocation7 + $0x1a0] sm:$0xff]
    %v666 = vld [vmem:[#allocation7 + $0x1a8] sm:$0xff]
    %v667 = vld [vmem:[#allocation7 + $0x1b0] sm:$0xff]
    %v668 = vld [vmem:[#allocation7 + $0x1b8] sm:$0xff]
    %v669 = vld [vmem:[#allocation7 + $0x1c0] sm:$0xff]
    %v670 = vld [vmem:[#allocation7 + $0x1c8] sm:$0xff]
    %v671 = vld [vmem:[#allocation7 + $0x1d0] sm:$0xff]
    %v672 = vld [vmem:[#allocation7 + $0x1d8] sm:$0xff]
    %v673 = vld [vmem:[#allocation7 + $0x1e0] sm:$0xff]
    %v674 = vld [vmem:[#allocation7 + $0x1e8] sm:$0xff]
    %v675 = vld [vmem:[#allocation7 + $0x1f0] sm:$0xff]
    %v676 = vld [vmem:[#allocation7 + $0x1f8] sm:$0xff]
    %v677 = vld [vmem:[#allocation7 + $0x200] sm:$0xff]
    %v678 = vld [vmem:[#allocation7 + $0x208] sm:$0xff]
    %v679 = vld [vmem:[#allocation7 + $0x210] sm:$0xff]
    %v680 = vld [vmem:[#allocation7 + $0x218] sm:$0xff]
    %v681 = vld [vmem:[#allocation7 + $0x220] sm:$0xff]
    %v682 = vld [vmem:[#allocation7 + $0x228] sm:$0xff]
    %v683 = vld [vmem:[#allocation7 + $0x230] sm:$0xff]
    %v684 = vld [vmem:[#allocation7 + $0x238] sm:$0xff]
    %v685 = vld [vmem:[#allocation7 + $0x240] sm:$0xff]
    %v686 = vld [vmem:[#allocation7 + $0x248] sm:$0xff]
    %v687 = vld [vmem:[#allocation7 + $0x250] sm:$0xff]
    %v688 = vld [vmem:[#allocation7 + $0x258] sm:$0xff]
    %v689 = vld [vmem:[#allocation7 + $0x260] sm:$0xff]
    %v690 = vld [vmem:[#allocation7 + $0x268] sm:$0xff]
    %v691 = vld [vmem:[#allocation7 + $0x270] sm:$0xff]
    %v692 = vld [vmem:[#allocation7 + $0x278] sm:$0xff]
    %v693 = vld [vmem:[#allocation7 + $0x280] sm:$0xff]
    %v694 = vld [vmem:[#allocation7 + $0x288] sm:$0xff]
    %v695 = vld [vmem:[#allocation7 + $0x290] sm:$0xff]
    %v696 = vld [vmem:[#allocation7 + $0x298] sm:$0xff]
    %v697 = vld [vmem:[#allocation7 + $0x2a0] sm:$0xff]
    %v698 = vld [vmem:[#allocation7 + $0x2a8] sm:$0xff]
    %v699 = vld [vmem:[#allocation7 + $0x2b0] sm:$0xff]
    %v700 = vld [vmem:[#allocation7 + $0x2b8] sm:$0xff]
    %v701 = vld [vmem:[#allocation7 + $0x2c0] sm:$0xff]
    %v702 = vld [vmem:[#allocation7 + $0x2c8] sm:$0xff]
    %v703 = vld [vmem:[#allocation7 + $0x2d0] sm:$0xff]
    %v704 = vld [vmem:[#allocation7 + $0x2d8] sm:$0xff]
    %v705 = vld [vmem:[#allocation7 + $0x2e0] sm:$0xff]
    %v706 = vld [vmem:[#allocation7 + $0x2e8] sm:$0xff]
    %v707 = vld [vmem:[#allocation7 + $0x2f0] sm:$0xff]
    %v708 = vld [vmem:[#allocation7 + $0x2f8] sm:$0xff]
    %v709 = vld [vmem:[%s2] sm:$0x3]
    %v711 = vlaneseq
    %v712 = vshrl.u32 %v711, 7
    %v713 = vsub.s32 0, %v712
    %v714 = vrot.slane %v709, %v713
    %v715 = vlaneseq
    %v716 = vshrl.u32 %v715, 7
    %v717 = vsub.s32 1, %v716
    %v718 = vrot.slane %v709, %v717
    %721 = vmatprep.subr.mxu0 %v614
    %722 = vmatpush1.msra.mxu0 %v613
    %723 = vmatprep.subr.mxu0 %v616
    %724 = vmatpush1.msra.mxu0 %v615
    %725 = vmatprep.subr.mxu0 %v618
    %726 = vmatpush1.msra.mxu0 %v617
    %727 = vmatprep.subr.mxu0 %v620
    %728 = vmatpush1.msra.mxu0 %v619
    %729 = vmatprep.subr.mxu0 %v622
    %730 = vmatpush1.msra.mxu0 %v621
    %731 = vmatprep.subr.mxu0 %v624
    %732 = vmatpush1.msra.mxu0 %v623
    %733 = vmatprep.subr.mxu0 %v626
    %734 = vmatpush1.msra.mxu0 %v625
    %735 = vmatprep.subr.mxu0 %v628
    %736 = vmatpush1.msra.mxu0 %v627
    %737 = vmatprep.subr.mxu0 %v630
    %738 = vmatpush1.msra.mxu0 %v629
    %739 = vmatprep.subr.mxu0 %v632
    %740 = vmatpush1.msra.mxu0 %v631
    %741 = vmatprep.subr.mxu0 %v634
    %742 = vmatpush1.msra.mxu0 %v633
    %743 = vmatprep.subr.mxu0 %v636
    %744 = vmatpush1.msra.mxu0 %v635
    %745 = vmatprep.subr.mxu0 %v638
    %746 = vmatpush1.msra.mxu0 %v637
    %747 = vmatprep.subr.mxu0 %v640
    %748 = vmatpush1.msra.mxu0 %v639
    %749 = vmatprep.subr.mxu0 %v642
    %750 = vmatpush1.msra.mxu0 %v641
    %751 = vmatprep.subr.mxu0 %v644
    %752 = vmatpush1.msra.mxu0 %v643
    %753 = vmatprep.subr.mxu0 %v646
    %754 = vmatpush1.msra.mxu0 %v645
    %755 = vmatprep.subr.mxu0 %v648
    %756 = vmatpush1.msra.mxu0 %v647
    %757 = vmatprep.subr.mxu0 %v650
    %758 = vmatpush1.msra.mxu0 %v649
    %759 = vmatprep.subr.mxu0 %v652
    %760 = vmatpush1.msra.mxu0 %v651
    %761 = vmatprep.subr.mxu0 %v654
    %762 = vmatpush1.msra.mxu0 %v653
    %763 = vmatprep.subr.mxu0 %v656
    %764 = vmatpush1.msra.mxu0 %v655
    %765 = vmatprep.subr.mxu0 %v658
    %766 = vmatpush1.msra.mxu0 %v657
    %767 = vmatprep.subr.mxu0 %v660
    %768 = vmatpush1.msra.mxu0 %v659
    %769 = vmatprep.subr.mxu0 %v662
    %770 = vmatpush1.msra.mxu0 %v661
    %771 = vmatprep.subr.mxu0 %v664
    %772 = vmatpush1.msra.mxu0 %v663
    %773 = vmatprep.subr.mxu0 %v666
    %774 = vmatpush1.msra.mxu0 %v665
    %775 = vmatprep.subr.mxu0 %v668
    %776 = vmatpush1.msra.mxu0 %v667
    %777 = vmatprep.subr.mxu0 %v670
    %778 = vmatpush1.msra.mxu0 %v669
    %779 = vmatprep.subr.mxu0 %v672
    %780 = vmatpush1.msra.mxu0 %v671
    %781 = vmatprep.subr.mxu0 %v674
    %782 = vmatpush1.msra.mxu0 %v673
    %783 = vmatprep.subr.mxu0 %v676
    %784 = vmatpush1.msra.mxu0 %v675
    %785 = vmatprep.mubr.f32.mxu0 %v566
    %786 = vmatmul.mubr.f32.gmra.mrb[0].mxu0 %v565
    %v787 = vpop.f32.mrb[0].mxu0
    %v788 = vadd.f32 %v714, %v787
    %v789 = vpop.f32.mrb[0].mxu0
    %v790 = vadd.f32 %v718, %v789
    %791 = vmatprep.mubr.f32.mxu0 %v569
    %792 = vmatmul.mubr.f32.gmra.mrb[0].mxu0 %v568
    %v793 = vpop.f32.mrb[0].mxu0
    %v794 = vadd.f32 %v714, %v793
    %v795 = vpop.f32.mrb[0].mxu0
    %v796 = vadd.f32 %v718, %v795
    %797 = vmatprep.mubr.f32.mxu0 %v572
    %798 = vmatmul.mubr.f32.gmra.mrb[0].mxu0 %v571
    %v799 = vpop.f32.mrb[0].mxu0
    %v800 = vadd.f32 %v714, %v799
    %v801 = vpop.f32.mrb[0].mxu0
    %v802 = vadd.f32 %v718, %v801
    %803 = vmatprep.mubr.f32.mxu0 %v575
    %804 = vmatmul.mubr.f32.gmra.mrb[0].mxu0 %v574
    %v805 = vpop.f32.mrb[0].mxu0
    %v806 = vadd.f32 %v714, %v805
    %v807 = vpop.f32.mrb[0].mxu0
    %v808 = vadd.f32 %v718, %v807
    %809 = vmatprep.mubr.f32.mxu0 %v578
    %810 = vmatmul.mubr.f32.gmra.mrb[0].mxu0 %v577
    %v811 = vpop.f32.mrb[0].mxu0
    %v812 = vadd.f32 %v714, %v811
    %v813 = vpop.f32.mrb[0].mxu0
    %v814 = vadd.f32 %v718, %v813
    %815 = vmatprep.mubr.f32.mxu0 %v581
    %816 = vmatmul.mubr.f32.gmra.mrb[0].mxu0 %v580
    %v817 = vpop.f32.mrb[0].mxu0
    %v818 = vadd.f32 %v714, %v817
    %v819 = vpop.f32.mrb[0].mxu0
    %v820 = vadd.f32 %v718, %v819
    %821 = vmatprep.mubr.f32.mxu0 %v584
    %822 = vmatmul.mubr.f32.gmra.mrb[0].mxu0 %v583
    %v823 = vpop.f32.mrb[0].mxu0
    %v824 = vadd.f32 %v714, %v823
    %v825 = vpop.f32.mrb[0].mxu0
    %v826 = vadd.f32 %v718, %v825
    %827 = vmatprep.mubr.f32.mxu0 %v587
    %828 = vmatmul.mubr.f32.gmra.mrb[0].mxu0 %v586
    %v829 = vpop.f32.mrb[0].mxu0
    %v830 = vadd.f32 %v714, %v829
    %v831 = vpop.f32.mrb[0].mxu0
    %v832 = vadd.f32 %v718, %v831
    %833 = vmatprep.mubr.f32.mxu0 %v590
    %834 = vmatmul.mubr.f32.gmra.mrb[0].mxu0 %v589
    %v835 = vpop.f32.mrb[0].mxu0
    %v836 = vadd.f32 %v714, %v835
    %v837 = vpop.f32.mrb[0].mxu0
    %v838 = vadd.f32 %v718, %v837
    %839 = vmatprep.mubr.f32.mxu0 %v593
    %840 = vmatmul.mubr.f32.gmra.mrb[0].mxu0 %v592
    %v841 = vpop.f32.mrb[0].mxu0
    %v842 = vadd.f32 %v714, %v841
    %v843 = vpop.f32.mrb[0].mxu0
    %v844 = vadd.f32 %v718, %v843
    %845 = vmatprep.mubr.f32.mxu0 %v596
    %846 = vmatmul.mubr.f32.gmra.mrb[0].mxu0 %v595
    %v847 = vpop.f32.mrb[0].mxu0
    %v848 = vadd.f32 %v714, %v847
    %v849 = vpop.f32.mrb[0].mxu0
    %v850 = vadd.f32 %v718, %v849
    %851 = vmatprep.mubr.f32.mxu0 %v599
    %852 = vmatmul.mubr.f32.gmra.mrb[0].mxu0 %v598
    %v853 = vpop.f32.mrb[0].mxu0
    %v854 = vadd.f32 %v714, %v853
    %v855 = vpop.f32.mrb[0].mxu0
    %v856 = vadd.f32 %v718, %v855
    %857 = vmatprep.mubr.f32.mxu0 %v602
    %858 = vmatmul.mubr.f32.gmra.mrb[0].mxu0 %v601
    %v859 = vpop.f32.mrb[0].mxu0
    %v860 = vadd.f32 %v714, %v859
    %v861 = vpop.f32.mrb[0].mxu0
    %v862 = vadd.f32 %v718, %v861
    %863 = vmatprep.mubr.f32.mxu0 %v605
    %864 = vmatmul.mubr.f32.gmra.mrb[0].mxu0 %v604
    %v865 = vpop.f32.mrb[0].mxu0
    %v866 = vadd.f32 %v714, %v865
    %v867 = vpop.f32.mrb[0].mxu0
    %v868 = vadd.f32 %v718, %v867
    %869 = vmatprep.mubr.f32.mxu0 %v608
    %870 = vmatmul.mubr.f32.gmra.mrb[0].mxu0 %v607
    %v871 = vpop.f32.mrb[0].mxu0
    %v872 = vadd.f32 %v714, %v871
    %v873 = vpop.f32.mrb[0].mxu0
    %v874 = vadd.f32 %v718, %v873
    %875 = vmatprep.mubr.f32.mxu0 %v611
    %876 = vmatmul.mubr.f32.gmra.mrb[0].mxu0 %v610
    %v877 = vpop.f32.mrb[0].mxu0
    %v878 = vadd.f32 %v714, %v877
    %v879 = vpop.f32.mrb[0].mxu0
    %v880 = vadd.f32 %v718, %v879
    %881 = vdwg.mxu0
    %882 = vmatprep.subr.mxu0 %v678
    %883 = vmatpush1.msra.mxu0 %v677
    %884 = vmatprep.subr.mxu0 %v680
    %885 = vmatpush1.msra.mxu0 %v679
    %886 = vmatprep.subr.mxu0 %v682
    %887 = vmatpush1.msra.mxu0 %v681
    %888 = vmatprep.subr.mxu0 %v684
    %889 = vmatpush1.msra.mxu0 %v683
    %890 = vmatprep.subr.mxu0 %v686
    %891 = vmatpush1.msra.mxu0 %v685
    %892 = vmatprep.subr.mxu0 %v688
    %893 = vmatpush1.msra.mxu0 %v687
    %894 = vmatprep.subr.mxu0 %v690
    %895 = vmatpush1.msra.mxu0 %v689
    %896 = vmatprep.subr.mxu0 %v692
    %897 = vmatpush1.msra.mxu0 %v691
    %898 = vmatprep.subr.mxu0 %v694
    %899 = vmatpush1.msra.mxu0 %v693
    %900 = vmatprep.subr.mxu0 %v696
    %901 = vmatpush1.msra.mxu0 %v695
    %902 = vmatprep.subr.mxu0 %v698
    %903 = vmatpush1.msra.mxu0 %v697
    %904 = vmatprep.subr.mxu0 %v700
    %905 = vmatpush1.msra.mxu0 %v699
    %906 = vmatprep.subr.mxu0 %v702
    %907 = vmatpush1.msra.mxu0 %v701
    %908 = vmatprep.subr.mxu0 %v704
    %909 = vmatpush1.msra.mxu0 %v703
    %910 = vmatprep.subr.mxu0 %v706
    %911 = vmatpush1.msra.mxu0 %v705
    %912 = vmatprep.subr.mxu0 %v708
    %913 = vmatpush1.msra.mxu0 %v707
    %914 = vmatprep.subr.mxu0 0.0
    %915 = vmatpush1.msra.mxu0 0.0
    %916 = vmatprep.subr.mxu0 0.0
    %917 = vmatpush1.msra.mxu0 0.0
    %918 = vmatprep.subr.mxu0 0.0
    %919 = vmatpush1.msra.mxu0 0.0
    %920 = vmatprep.subr.mxu0 0.0
    %921 = vmatpush1.msra.mxu0 0.0
    %922 = vmatprep.subr.mxu0 0.0
    %923 = vmatpush1.msra.mxu0 0.0
    %924 = vmatprep.subr.mxu0 0.0
    %925 = vmatpush1.msra.mxu0 0.0
    %926 = vmatprep.subr.mxu0 0.0
    %927 = vmatpush1.msra.mxu0 0.0
    %928 = vmatprep.subr.mxu0 0.0
    %929 = vmatpush1.msra.mxu0 0.0
    %930 = vmatprep.subr.mxu0 0.0
    %931 = vmatpush1.msra.mxu0 0.0
    %932 = vmatprep.subr.mxu0 0.0
    %933 = vmatpush1.msra.mxu0 0.0
    %934 = vmatprep.subr.mxu0 0.0
    %935 = vmatpush1.msra.mxu0 0.0
    %936 = vmatprep.subr.mxu0 0.0
    %937 = vmatpush1.msra.mxu0 0.0
    %938 = vmatprep.subr.mxu0 0.0
    %939 = vmatpush1.msra.mxu0 0.0
    %940 = vmatprep.subr.mxu0 0.0
    %941 = vmatpush1.msra.mxu0 0.0
    %942 = vmatprep.subr.mxu0 0.0
    %943 = vmatpush1.msra.mxu0 0.0
    %944 = vmatprep.subr.mxu0 0.0
    %945 = vmatpush1.msra.mxu0 0.0
    %946 = vmatprep.mubr.f32.mxu0 0.0
    %947 = vmatmul.mubr.f32.gmra.mrb[0].mxu0 %v567
    %v948 = vpop.f32.mrb[0].mxu0
    %v949 = vadd.f32 %v788, %v948
    %v950 = vpop.f32.mrb[0].mxu0
    %v951 = vadd.f32 %v790, %v950
    %952 = vmatprep.mubr.f32.mxu0 0.0
    %953 = vmatmul.mubr.f32.gmra.mrb[0].mxu0 %v570
    %v954 = vpop.f32.mrb[0].mxu0
    %v955 = vadd.f32 %v794, %v954
    %v956 = vpop.f32.mrb[0].mxu0
    %v957 = vadd.f32 %v796, %v956
    %958 = vmatprep.mubr.f32.mxu0 0.0
    %959 = vmatmul.mubr.f32.gmra.mrb[0].mxu0 %v573
    %v960 = vpop.f32.mrb[0].mxu0
    %v961 = vadd.f32 %v800, %v960
    %v962 = vpop.f32.mrb[0].mxu0
    %v963 = vadd.f32 %v802, %v962
    %964 = vmatprep.mubr.f32.mxu0 0.0
    %965 = vmatmul.mubr.f32.gmra.mrb[0].mxu0 %v576
    %v966 = vpop.f32.mrb[0].mxu0
    %v967 = vadd.f32 %v806, %v966
    %v968 = vpop.f32.mrb[0].mxu0
    %v969 = vadd.f32 %v808, %v968
    %970 = vmatprep.mubr.f32.mxu0 0.0
    %971 = vmatmul.mubr.f32.gmra.mrb[0].mxu0 %v579
    %v972 = vpop.f32.mrb[0].mxu0
    %v973 = vadd.f32 %v812, %v972
    %v974 = vpop.f32.mrb[0].mxu0
    %v975 = vadd.f32 %v814, %v974
    %976 = vmatprep.mubr.f32.mxu0 0.0
    %977 = vmatmul.mubr.f32.gmra.mrb[0].mxu0 %v582
    %v978 = vpop.f32.mrb[0].mxu0
    %v979 = vadd.f32 %v818, %v978
    %v980 = vpop.f32.mrb[0].mxu0
    %v981 = vadd.f32 %v820, %v980
    %982 = vmatprep.mubr.f32.mxu0 0.0
    %983 = vmatmul.mubr.f32.gmra.mrb[0].mxu0 %v585
    %v984 = vpop.f32.mrb[0].mxu0
    %v985 = vadd.f32 %v824, %v984
    %v986 = vpop.f32.mrb[0].mxu0
    %v987 = vadd.f32 %v826, %v986
    %988 = vmatprep.mubr.f32.mxu0 0.0
    %989 = vmatmul.mubr.f32.gmra.mrb[0].mxu0 %v588
    %v990 = vpop.f32.mrb[0].mxu0
    %v991 = vadd.f32 %v830, %v990
    %v992 = vpop.f32.mrb[0].mxu0
    %v993 = vadd.f32 %v832, %v992
    %994 = vmatprep.mubr.f32.mxu0 0.0
    %995 = vmatmul.mubr.f32.gmra.mrb[0].mxu0 %v591
    %v996 = vpop.f32.mrb[0].mxu0
    %v997 = vadd.f32 %v836, %v996
    %v998 = vpop.f32.mrb[0].mxu0
    %v999 = vadd.f32 %v838, %v998
    %1000 = vmatprep.mubr.f32.mxu0 0.0
    %1001 = vmatmul.mubr.f32.gmra.mrb[0].mxu0 %v594
    %v1002 = vpop.f32.mrb[0].mxu0
    %v1003 = vadd.f32 %v842, %v1002
    %v1004 = vpop.f32.mrb[0].mxu0
    %v1005 = vadd.f32 %v844, %v1004
    %1006 = vmatprep.mubr.f32.mxu0 0.0
    %1007 = vmatmul.mubr.f32.gmra.mrb[0].mxu0 %v597
    %v1008 = vpop.f32.mrb[0].mxu0
    %v1009 = vadd.f32 %v848, %v1008
    %v1010 = vpop.f32.mrb[0].mxu0
    %v1011 = vadd.f32 %v850, %v1010
    %1012 = vmatprep.mubr.f32.mxu0 0.0
    %1013 = vmatmul.mubr.f32.gmra.mrb[0].mxu0 %v600
    %v1014 = vpop.f32.mrb[0].mxu0
    %v1015 = vadd.f32 %v854, %v1014
    %v1016 = vpop.f32.mrb[0].mxu0
    %v1017 = vadd.f32 %v856, %v1016
    %1018 = vmatprep.mubr.f32.mxu0 0.0
    %1019 = vmatmul.mubr.f32.gmra.mrb[0].mxu0 %v603
    %v1020 = vpop.f32.mrb[0].mxu0
    %v1021 = vadd.f32 %v860, %v1020
    %v1022 = vpop.f32.mrb[0].mxu0
    %v1023 = vadd.f32 %v862, %v1022
    %1024 = vmatprep.mubr.f32.mxu0 0.0
    %1025 = vmatmul.mubr.f32.gmra.mrb[0].mxu0 %v606
    %v1026 = vpop.f32.mrb[0].mxu0
    %v1027 = vadd.f32 %v866, %v1026
    %v1028 = vpop.f32.mrb[0].mxu0
    %v1029 = vadd.f32 %v868, %v1028
    %1030 = vmatprep.mubr.f32.mxu0 0.0
    %1031 = vmatmul.mubr.f32.gmra.mrb[0].mxu0 %v609
    %v1032 = vpop.f32.mrb[0].mxu0
    %v1033 = vadd.f32 %v872, %v1032
    %v1034 = vpop.f32.mrb[0].mxu0
    %v1035 = vadd.f32 %v874, %v1034
    %1036 = vmatprep.mubr.f32.mxu0 0.0
    %1037 = vmatmul.mubr.f32.gmra.mrb[0].mxu0 %v612
    %v1038 = vpop.f32.mrb[0].mxu0
    %v1039 = vadd.f32 %v878, %v1038
    %v1040 = vpop.f32.mrb[0].mxu0
    %v1041 = vadd.f32 %v880, %v1040
    %1042 = vdwg.mxu0
    %v1043 = vmax.f32 %v949, 0.0
    %v1044 = vmax.f32 %v951, 0.0
    %v1045 = vmax.f32 %v955, 0.0
    %v1046 = vmax.f32 %v957, 0.0
    %v1047 = vmax.f32 %v961, 0.0
    %v1048 = vmax.f32 %v963, 0.0
    %v1049 = vmax.f32 %v967, 0.0
    %v1050 = vmax.f32 %v969, 0.0
    %v1051 = vmax.f32 %v973, 0.0
    %v1052 = vmax.f32 %v975, 0.0
    %v1053 = vmax.f32 %v979, 0.0
    %v1054 = vmax.f32 %v981, 0.0
    %v1055 = vmax.f32 %v985, 0.0
    %v1056 = vmax.f32 %v987, 0.0
    %v1057 = vmax.f32 %v991, 0.0
    %v1058 = vmax.f32 %v993, 0.0
    %v1059 = vmax.f32 %v997, 0.0
    %v1060 = vmax.f32 %v999, 0.0
    %v1061 = vmax.f32 %v1003, 0.0
    %v1062 = vmax.f32 %v1005, 0.0
    %v1063 = vmax.f32 %v1009, 0.0
    %v1064 = vmax.f32 %v1011, 0.0
    %v1065 = vmax.f32 %v1015, 0.0
    %v1066 = vmax.f32 %v1017, 0.0
    %v1067 = vmax.f32 %v1021, 0.0
    %v1068 = vmax.f32 %v1023, 0.0
    %v1069 = vmax.f32 %v1027, 0.0
    %v1070 = vmax.f32 %v1029, 0.0
    %v1071 = vmax.f32 %v1033, 0.0
    %v1072 = vmax.f32 %v1035, 0.0
    %v1073 = vmax.f32 %v1039, 0.0
    %v1074 = vmax.f32 %v1041, 0.0
    %v1107 = vrot.slane %v1043, 7
    %v1108 = vrot.slane %v1044, 7
    %v1109 = vrot.slane %v1045, 7
    %v1110 = vsel %vm291, %v1107, %v1109
    %v1111 = vrot.slane %v1046, 7
    %v1112 = vsel %vm291, %v1108, %v1111
    %v1113 = vrot.slane %v1047, 7
    %v1114 = vsel %vm291, %v1109, %v1113
    %v1115 = vrot.slane %v1048, 7
    %v1116 = vsel %vm291, %v1111, %v1115
    %v1117 = vrot.slane %v1049, 7
    %v1118 = vsel %vm291, %v1113, %v1117
    %v1119 = vrot.slane %v1050, 7
    %v1120 = vsel %vm291, %v1115, %v1119
    %v1121 = vrot.slane %v1051, 7
    %v1122 = vsel %vm291, %v1117, %v1121
    %v1123 = vrot.slane %v1052, 7
    %v1124 = vsel %vm291, %v1119, %v1123
    %v1125 = vrot.slane %v1053, 7
    %v1126 = vsel %vm291, %v1121, %v1125
    %v1127 = vrot.slane %v1054, 7
    %v1128 = vsel %vm291, %v1123, %v1127
    %v1129 = vrot.slane %v1055, 7
    %v1130 = vsel %vm291, %v1125, %v1129
    %v1131 = vrot.slane %v1056, 7
    %v1132 = vsel %vm291, %v1127, %v1131
    %v1133 = vrot.slane %v1057, 7
    %v1134 = vsel %vm291, %v1129, %v1133
    %v1135 = vrot.slane %v1058, 7
    %v1136 = vsel %vm291, %v1131, %v1135
    %v1137 = vrot.slane %v1059, 7
    %v1138 = vsel %vm291, %v1133, %v1137
    %v1139 = vrot.slane %v1060, 7
    %v1140 = vsel %vm291, %v1135, %v1139
    %v1141 = vrot.slane %v1061, 7
    %v1142 = vsel %vm291, %v1137, %v1141
    %v1143 = vrot.slane %v1062, 7
    %v1144 = vsel %vm291, %v1139, %v1143
    %v1145 = vrot.slane %v1063, 7
    %v1146 = vsel %vm291, %v1141, %v1145
    %v1147 = vrot.slane %v1064, 7
    %v1148 = vsel %vm291, %v1143, %v1147
    %v1149 = vrot.slane %v1065, 7
    %v1150 = vsel %vm291, %v1145, %v1149
    %v1151 = vrot.slane %v1066, 7
    %v1152 = vsel %vm291, %v1147, %v1151
    %v1153 = vrot.slane %v1067, 7
    %v1154 = vsel %vm291, %v1149, %v1153
    %v1155 = vrot.slane %v1068, 7
    %v1156 = vsel %vm291, %v1151, %v1155
    %v1157 = vrot.slane %v1069, 7
    %v1158 = vsel %vm291, %v1153, %v1157
    %v1159 = vrot.slane %v1070, 7
    %v1160 = vsel %vm291, %v1155, %v1159
    %v1161 = vrot.slane %v1071, 7
    %v1162 = vsel %vm291, %v1157, %v1161
    %v1163 = vrot.slane %v1072, 7
    %v1164 = vsel %vm291, %v1159, %v1163
    %v1165 = vrot.slane %v1073, 7
    %v1166 = vsel %vm291, %v1161, %v1165
    %v1167 = vrot.slane %v1074, 7
    %v1168 = vsel %vm291, %v1163, %v1167
    %v1201 = vsel %vm291, 0.0, %v1107
    %v1202 = vsel %vm291, 0.0, %v1108
    %v1203 = vrot.slane %v1043, 1
    %v1204 = vrot.slane %v1045, 1
    %v1205 = vsel %vm340, %v1203, %v1204
    %v1206 = vrot.slane %v1044, 1
    %v1207 = vrot.slane %v1046, 1
    %v1208 = vsel %vm340, %v1206, %v1207
    %v1209 = vrot.slane %v1047, 1
    %v1210 = vsel %vm340, %v1204, %v1209
    %v1211 = vrot.slane %v1048, 1
    %v1212 = vsel %vm340, %v1207, %v1211
    %v1213 = vrot.slane %v1049, 1
    %v1214 = vsel %vm340, %v1209, %v1213
    %v1215 = vrot.slane %v1050, 1
    %v1216 = vsel %vm340, %v1211, %v1215
    %v1217 = vrot.slane %v1051, 1
    %v1218 = vsel %vm340, %v1213, %v1217
    %v1219 = vrot.slane %v1052, 1
    %v1220 = vsel %vm340, %v1215, %v1219
    %v1221 = vrot.slane %v1053, 1
    %v1222 = vsel %vm340, %v1217, %v1221
    %v1223 = vrot.slane %v1054, 1
    %v1224 = vsel %vm340, %v1219, %v1223
    %v1225 = vrot.slane %v1055, 1
    %v1226 = vsel %vm340, %v1221, %v1225
    %v1227 = vrot.slane %v1056, 1
    %v1228 = vsel %vm340, %v1223, %v1227
    %v1229 = vrot.slane %v1057, 1
    %v1230 = vsel %vm340, %v1225, %v1229
    %v1231 = vrot.slane %v1058, 1
    %v1232 = vsel %vm340, %v1227, %v1231
    %v1233 = vrot.slane %v1059, 1
    %v1234 = vsel %vm340, %v1229, %v1233
    %v1235 = vrot.slane %v1060, 1
    %v1236 = vsel %vm340, %v1231, %v1235
    %v1237 = vrot.slane %v1061, 1
    %v1238 = vsel %vm340, %v1233, %v1237
    %v1239 = vrot.slane %v1062, 1
    %v1240 = vsel %vm340, %v1235, %v1239
    %v1241 = vrot.slane %v1063, 1
    %v1242 = vsel %vm340, %v1237, %v1241
    %v1243 = vrot.slane %v1064, 1
    %v1244 = vsel %vm340, %v1239, %v1243
    %v1245 = vrot.slane %v1065, 1
    %v1246 = vsel %vm340, %v1241, %v1245
    %v1247 = vrot.slane %v1066, 1
    %v1248 = vsel %vm340, %v1243, %v1247
    %v1249 = vrot.slane %v1067, 1
    %v1250 = vsel %vm340, %v1245, %v1249
    %v1251 = vrot.slane %v1068, 1
    %v1252 = vsel %vm340, %v1247, %v1251
    %v1253 = vrot.slane %v1069, 1
    %v1254 = vsel %vm340, %v1249, %v1253
    %v1255 = vrot.slane %v1070, 1
    %v1256 = vsel %vm340, %v1251, %v1255
    %v1257 = vrot.slane %v1071, 1
    %v1258 = vsel %vm340, %v1253, %v1257
    %v1259 = vrot.slane %v1072, 1
    %v1260 = vsel %vm340, %v1255, %v1259
    %v1261 = vrot.slane %v1073, 1
    %v1262 = vsel %vm340, %v1257, %v1261
    %v1263 = vrot.slane %v1074, 1
    %v1264 = vsel %vm340, %v1259, %v1263
    %v1297 = vsel %vm340, %v1261, 0.0
    %v1298 = vsel %vm340, %v1263, 0.0
    %v1299 = vld [vmem:[%s3] sm:$0x77]
    %v1301 = vcombine.high %v1299, %v1299
    %1303 = vmatprep.subr.mxu0 %v1202
    %1304 = vmatpush1.xpose.msra.mxu0 %v1201
    %1305 = vmatprep.subr.mxu0 %v1112
    %1306 = vmatpush1.xpose.msra.mxu0 %v1110
    %1307 = vmatprep.subr.mxu0 %v1116
    %1308 = vmatpush1.xpose.msra.mxu0 %v1114
    %1309 = vmatprep.subr.mxu0 %v1120
    %1310 = vmatpush1.xpose.msra.mxu0 %v1118
    %1311 = vmatprep.subr.mxu0 %v1124
    %1312 = vmatpush1.xpose.msra.mxu0 %v1122
    %1313 = vmatprep.subr.mxu0 %v1128
    %1314 = vmatpush1.xpose.msra.mxu0 %v1126
    %1315 = vmatprep.subr.mxu0 %v1132
    %1316 = vmatpush1.xpose.msra.mxu0 %v1130
    %1317 = vmatprep.subr.mxu0 %v1136
    %1318 = vmatpush1.xpose.msra.mxu0 %v1134
    %1319 = vmatprep.subr.mxu0 %v1140
    %1320 = vmatpush1.xpose.msra.mxu0 %v1138
    %1321 = vmatprep.subr.mxu0 %v1144
    %1322 = vmatpush1.xpose.msra.mxu0 %v1142
    %1323 = vmatprep.subr.mxu0 %v1148
    %1324 = vmatpush1.xpose.msra.mxu0 %v1146
    %1325 = vmatprep.subr.mxu0 %v1152
    %1326 = vmatpush1.xpose.msra.mxu0 %v1150
    %1327 = vmatprep.subr.mxu0 %v1156
    %1328 = vmatpush1.xpose.msra.mxu0 %v1154
    %1329 = vmatprep.subr.mxu0 %v1160
    %1330 = vmatpush1.xpose.msra.mxu0 %v1158
    %1331 = vmatprep.subr.mxu0 %v1164
    %1332 = vmatpush1.xpose.msra.mxu0 %v1162
    %1333 = vmatprep.subr.mxu0 %v1168
    %1334 = vmatpush1.xpose.msra.mxu0 %v1166
    %1335 = vmatprep.subr.mxu0 0.0
    %1336 = vmatpush1.xpose.msra.mxu0 0.0
    %1337 = vmatprep.subr.mxu0 0.0
    %1338 = vmatpush1.xpose.msra.mxu0 0.0
    %1339 = vmatprep.subr.mxu0 0.0
    %1340 = vmatpush1.xpose.msra.mxu0 0.0
    %1341 = vmatprep.subr.mxu0 0.0
    %1342 = vmatpush1.xpose.msra.mxu0 0.0
    %1343 = vmatprep.subr.mxu0 0.0
    %1344 = vmatpush1.xpose.msra.mxu0 0.0
    %1345 = vmatprep.subr.mxu0 0.0
    %1346 = vmatpush1.xpose.msra.mxu0 0.0
    %1347 = vmatprep.subr.mxu0 0.0
    %1348 = vmatpush1.xpose.msra.mxu0 0.0
    %1349 = vmatprep.subr.mxu0 0.0
    %1350 = vmatpush1.xpose.msra.mxu0 0.0
    %1351 = vmatprep.subr.mxu0 0.0
    %1352 = vmatpush1.xpose.msra.mxu0 0.0
    %1353 = vmatprep.subr.mxu0 0.0
    %1354 = vmatpush1.xpose.msra.mxu0 0.0
    %1355 = vmatprep.subr.mxu0 0.0
    %1356 = vmatpush1.xpose.msra.mxu0 0.0
    %1357 = vmatprep.subr.mxu0 0.0
    %1358 = vmatpush1.xpose.msra.mxu0 0.0
    %1359 = vmatprep.subr.mxu0 0.0
    %1360 = vmatpush1.xpose.msra.mxu0 0.0
    %1361 = vmatprep.subr.mxu0 0.0
    %1362 = vmatpush1.xpose.msra.mxu0 0.0
    %1363 = vmatprep.subr.mxu0 0.0
    %1364 = vmatpush1.xpose.msra.mxu0 0.0
    %1365 = vmatprep.subr.mxu0 0.0
    %1366 = vmatpush1.xpose.msra.mxu0 0.0
    %1367 = vmatprep.mubr.f32.mxu0 %v1301
    %1368 = vmatmul.mubr.f32.gmra.mrb[0].mxu0 %v1299
    %v1369 = vpop.f32.mrb[0].mxu0
    %v1370 = vadd.f32 0.0, %v1369
    %v1371 = vpop.f32.mrb[0].mxu0
    %1372 = vdwg.mxu0
    %1373 = vmatprep.subr.mxu0 %v1044
    %1374 = vmatpush1.xpose.msra.mxu0 %v1043
    %1375 = vmatprep.subr.mxu0 %v1046
    %1376 = vmatpush1.xpose.msra.mxu0 %v1045
    %1377 = vmatprep.subr.mxu0 %v1048
    %1378 = vmatpush1.xpose.msra.mxu0 %v1047
    %1379 = vmatprep.subr.mxu0 %v1050
    %1380 = vmatpush1.xpose.msra.mxu0 %v1049
    %1381 = vmatprep.subr.mxu0 %v1052
    %1382 = vmatpush1.xpose.msra.mxu0 %v1051
    %1383 = vmatprep.subr.mxu0 %v1054
    %1384 = vmatpush1.xpose.msra.mxu0 %v1053
    %1385 = vmatprep.subr.mxu0 %v1056
    %1386 = vmatpush1.xpose.msra.mxu0 %v1055
    %1387 = vmatprep.subr.mxu0 %v1058
    %1388 = vmatpush1.xpose.msra.mxu0 %v1057
    %1389 = vmatprep.subr.mxu0 %v1060
    %1390 = vmatpush1.xpose.msra.mxu0 %v1059
    %1391 = vmatprep.subr.mxu0 %v1062
    %1392 = vmatpush1.xpose.msra.mxu0 %v1061
    %1393 = vmatprep.subr.mxu0 %v1064
    %1394 = vmatpush1.xpose.msra.mxu0 %v1063
    %1395 = vmatprep.subr.mxu0 %v1066
    %1396 = vmatpush1.xpose.msra.mxu0 %v1065
    %1397 = vmatprep.subr.mxu0 %v1068
    %1398 = vmatpush1.xpose.msra.mxu0 %v1067
    %1399 = vmatprep.subr.mxu0 %v1070
    %1400 = vmatpush1.xpose.msra.mxu0 %v1069
    %1401 = vmatprep.subr.mxu0 %v1072
    %1402 = vmatpush1.xpose.msra.mxu0 %v1071
    %1403 = vmatprep.subr.mxu0 %v1074
    %1404 = vmatpush1.xpose.msra.mxu0 %v1073
    %1405 = vmatprep.subr.mxu0 0.0
    %1406 = vmatpush1.xpose.msra.mxu0 0.0
    %1407 = vmatprep.subr.mxu0 0.0
    %1408 = vmatpush1.xpose.msra.mxu0 0.0
    %1409 = vmatprep.subr.mxu0 0.0
    %1410 = vmatpush1.xpose.msra.mxu0 0.0
    %1411 = vmatprep.subr.mxu0 0.0
    %1412 = vmatpush1.xpose.msra.mxu0 0.0
    %1413 = vmatprep.subr.mxu0 0.0
    %1414 = vmatpush1.xpose.msra.mxu0 0.0
    %1415 = vmatprep.subr.mxu0 0.0
    %1416 = vmatpush1.xpose.msra.mxu0 0.0
    %1417 = vmatprep.subr.mxu0 0.0
    %1418 = vmatpush1.xpose.msra.mxu0 0.0
    %1419 = vmatprep.subr.mxu0 0.0
    %1420 = vmatpush1.xpose.msra.mxu0 0.0
    %1421 = vmatprep.subr.mxu0 0.0
    %1422 = vmatpush1.xpose.msra.mxu0 0.0
    %1423 = vmatprep.subr.mxu0 0.0
    %1424 = vmatpush1.xpose.msra.mxu0 0.0
    %1425 = vmatprep.subr.mxu0 0.0
    %1426 = vmatpush1.xpose.msra.mxu0 0.0
    %1427 = vmatprep.subr.mxu0 0.0
    %1428 = vmatpush1.xpose.msra.mxu0 0.0
    %1429 = vmatprep.subr.mxu0 0.0
    %1430 = vmatpush1.xpose.msra.mxu0 0.0
    %1431 = vmatprep.subr.mxu0 0.0
    %1432 = vmatpush1.xpose.msra.mxu0 0.0
    %1433 = vmatprep.subr.mxu0 0.0
    %1434 = vmatpush1.xpose.msra.mxu0 0.0
    %1435 = vmatprep.subr.mxu0 0.0
    %1436 = vmatpush1.xpose.msra.mxu0 0.0
    %1437 = vmatprep.mubr.f32.mxu0 %v1301
    %1438 = vmatmul.mubr.f32.gmra.mrb[0].mxu0 %v1299
    %v1439 = vpop.f32.mrb[0].mxu0
    %v1440 = vadd.f32 0.0, %v1439
    %v1441 = vpop.f32.mrb[0].mxu0
    %1442 = vdwg.mxu0
    %1443 = vmatprep.subr.mxu0 %v1208
    %1444 = vmatpush1.xpose.msra.mxu0 %v1205
    %1445 = vmatprep.subr.mxu0 %v1212
    %1446 = vmatpush1.xpose.msra.mxu0 %v1210
    %1447 = vmatprep.subr.mxu0 %v1216
    %1448 = vmatpush1.xpose.msra.mxu0 %v1214
    %1449 = vmatprep.subr.mxu0 %v1220
    %1450 = vmatpush1.xpose.msra.mxu0 %v1218
    %1451 = vmatprep.subr.mxu0 %v1224
    %1452 = vmatpush1.xpose.msra.mxu0 %v1222
    %1453 = vmatprep.subr.mxu0 %v1228
    %1454 = vmatpush1.xpose.msra.mxu0 %v1226
    %1455 = vmatprep.subr.mxu0 %v1232
    %1456 = vmatpush1.xpose.msra.mxu0 %v1230
    %1457 = vmatprep.subr.mxu0 %v1236
    %1458 = vmatpush1.xpose.msra.mxu0 %v1234
    %1459 = vmatprep.subr.mxu0 %v1240
    %1460 = vmatpush1.xpose.msra.mxu0 %v1238
    %1461 = vmatprep.subr.mxu0 %v1244
    %1462 = vmatpush1.xpose.msra.mxu0 %v1242
    %1463 = vmatprep.subr.mxu0 %v1248
    %1464 = vmatpush1.xpose.msra.mxu0 %v1246
    %1465 = vmatprep.subr.mxu0 %v1252
    %1466 = vmatpush1.xpose.msra.mxu0 %v1250
    %1467 = vmatprep.subr.mxu0 %v1256
    %1468 = vmatpush1.xpose.msra.mxu0 %v1254
    %1469 = vmatprep.subr.mxu0 %v1260
    %1470 = vmatpush1.xpose.msra.mxu0 %v1258
    %1471 = vmatprep.subr.mxu0 %v1264
    %1472 = vmatpush1.xpose.msra.mxu0 %v1262
    %1473 = vmatprep.subr.mxu0 %v1298
    %1474 = vmatpush1.xpose.msra.mxu0 %v1297
    %1475 = vmatprep.subr.mxu0 0.0
    %1476 = vmatpush1.xpose.msra.mxu0 0.0
    %1477 = vmatprep.subr.mxu0 0.0
    %1478 = vmatpush1.xpose.msra.mxu0 0.0
    %1479 = vmatprep.subr.mxu0 0.0
    %1480 = vmatpush1.xpose.msra.mxu0 0.0
    %1481 = vmatprep.subr.mxu0 0.0
    %1482 = vmatpush1.xpose.msra.mxu0 0.0
    %1483 = vmatprep.subr.mxu0 0.0
    %1484 = vmatpush1.xpose.msra.mxu0 0.0
    %1485 = vmatprep.subr.mxu0 0.0
    %1486 = vmatpush1.xpose.msra.mxu0 0.0
    %1487 = vmatprep.subr.mxu0 0.0
    %1488 = vmatpush1.xpose.msra.mxu0 0.0
    %1489 = vmatprep.subr.mxu0 0.0
    %1490 = vmatpush1.xpose.msra.mxu0 0.0
    %1491 = vmatprep.subr.mxu0 0.0
    %1492 = vmatpush1.xpose.msra.mxu0 0.0
    %1493 = vmatprep.subr.mxu0 0.0
    %1494 = vmatpush1.xpose.msra.mxu0 0.0
    %1495 = vmatprep.subr.mxu0 0.0
    %1496 = vmatpush1.xpose.msra.mxu0 0.0
    %1497 = vmatprep.subr.mxu0 0.0
    %1498 = vmatpush1.xpose.msra.mxu0 0.0
    %1499 = vmatprep.subr.mxu0 0.0
    %1500 = vmatpush1.xpose.msra.mxu0 0.0
    %1501 = vmatprep.subr.mxu0 0.0
    %1502 = vmatpush1.xpose.msra.mxu0 0.0
    %1503 = vmatprep.subr.mxu0 0.0
    %1504 = vmatpush1.xpose.msra.mxu0 0.0
    %1505 = vmatprep.subr.mxu0 0.0
    %1506 = vmatpush1.xpose.msra.mxu0 0.0
    %1507 = vmatprep.mubr.f32.mxu0 %v1301
    %1508 = vmatmul.mubr.f32.gmra.mrb[0].mxu0 %v1299
    %v1509 = vpop.f32.mrb[0].mxu0
    %v1510 = vadd.f32 0.0, %v1509
    %v1511 = vpop.f32.mrb[0].mxu0
    %1512 = vdwg.mxu0
    %v1513 = vlaneseq
    %v1514 = vand.u32 %v1513, 127
    %vm1515 = vcmp.lt.s32.totalorder %v1514, 0
    %v1516 = vsub.s32 0, %v1514
    %v1517 = vsel %vm1515, %v1516, %v1514
    %v1518 = vshrl.u32 %v1517, 4
    %v1519 = vand.u32 %v1517, 15
    %v1520 = vsub.s32 0, %v1519
    %v1521 = vsel %vm1515, %v1520, %v1519
    %vm1522 = vcmp.ne.s32.totalorder %v1521, 0
    %vm1523 = vcmp.lt.s32.totalorder %v1521, 0
    %vm1524 = vmand %vm1523, %vm1522
    %v1525 = vadd.s32 %v1521, 16
    %v1526 = vsel %vm1524, %v1525, %v1521
    %vm1527 = vcmp.eq.s32.totalorder %v1526, 0
    %v1528 = vsel %vm1527, 0.0, %v1370
    %vm1529 = vcmp.eq.s32.totalorder %v1526, 15
    %v1530 = vsel %vm1529, 0.0, %v1510
    %v1532 = vrot.slane %v1440, 1
    %v1534 = vadd.f32 %v1528, %v1532
    %v1536 = vrot.slane %v1530, 2
    %v1538 = vadd.f32 %v1534, %v1536
    %s1539 = sld [smem:[#allocation3]]
    %v1540 = vstv %s1539
    %v1541 = vadd.f32 %v1538, %v1540
    %1542 = vst [vmem:[#allocation9] sm:$0x1] %v1541
    // Predicated region
    $region30: #{tpu_custom_call.1} parent=1 // pred_check
      _
    $region31: #{tpu_custom_call.1} parent=1 // pred_check_branch
      %1544 = sbr.rel (0) target = $region33
    $region32: #{tpu_custom_call.1} parent=1 // pred_region
      %s1546 = ssub.s32 16, 16
      %1547 = vsyncadd [#allocation6], %s1546
      %s1549 = sshll.u32 [#allocation9], 4
      %s1550 = int_to_ptr.vmem [resolvable:$true] %s1549
      %1552 = dma.vmem_to_hbm [thread:$0]  %s1550, 16, %s5, [#allocation6]
    $region33: #{tpu_custom_call.1} parent=1 // pred_fallthru
      _
    // Predicated region
    $region34: #{tpu_custom_call.1} parent=1 // pred_check
      _
    $region35: #{tpu_custom_call.1} parent=1 // pred_check_branch
      %1554 = sbr.rel (0) target = $region37
    $region36: #{tpu_custom_call.1} parent=1 // pred_region
      %1555 = dma.done [#allocation6], 16
    $region37: #{tpu_custom_call.1} parent=1 // pred_fallthru
      _
    %1556 = vsyncpa [#allocation5], 1
    %1557 = vsyncpa [#allocation8], 1
    %1558 = vsyncpa [#allocation6], 1

</llo_original>
